<compile_context>
chip_gen: v6e
topology: v6e:2x2x1
jax: 0.10.0
libtpu: 0.0.40
codegen_flags: <defaults>
</compile_context>

<pallas_src>
import functools

import jax
import jax.numpy as jnp
from jax.experimental import pallas as pl
from jax.experimental.pallas import tpu as pltpu


def _round_up(x, m):
    return (x + m - 1) // m * m


# ----------------------------- Pallas kernels ------------------------------


def _matmul_bias_kernel(x_ref, w_ref, b_ref, o_ref, *, relu_cols):
    """(tm, K) @ (K, N) bf16 matmul -> f32, + per-channel bias; ReLU only on the
    first `relu_cols` output columns (BN scale is pre-folded into W)."""
    y = jnp.dot(x_ref[...], w_ref[...], preferred_element_type=jnp.float32)
    y = y + b_ref[...]
    n = y.shape[1]
    if relu_cols >= n:
        y = jnp.maximum(y, 0.0)
    elif relu_cols > 0:
        col = jax.lax.broadcasted_iota(jnp.int32, y.shape, 1)
        y = jnp.where(col < relu_cols, jnp.maximum(y, 0.0), y)
    o_ref[...] = y.astype(o_ref.dtype)


def matmul_bias(x, w, bias, *, relu_cols, tm=512):
    """x: (M, K) bf16, w: (K, N) bf16 (BN scale folded), bias: (1, N) f32 -> (M, N) f32."""
    M, K = x.shape
    N = w.shape[1]
    if M <= tm:
        tm = _round_up(M, 8)          # single block covering all rows
    Mp = _round_up(M, tm)
    if Mp != M:
        x = jnp.pad(x, ((0, Mp - M), (0, 0)))
    kernel = functools.partial(_matmul_bias_kernel, relu_cols=relu_cols)
    out = pl.pallas_call(
        kernel,
        out_shape=jax.ShapeDtypeStruct((Mp, N), jnp.float32),
        grid=(Mp // tm,),
        in_specs=[
            pl.BlockSpec((tm, K), lambda i: (i, 0)),
            pl.BlockSpec((K, N), lambda i: (0, 0)),
            pl.BlockSpec((1, N), lambda i: (0, 0)),
        ],
        out_specs=pl.BlockSpec((tm, N), lambda i: (i, 0)),
        compiler_params=pltpu.CompilerParams(dimension_semantics=("parallel",)),
    )(x, w, bias)
    return out[:M] if Mp != M else out


def _conv2_conv3_se_kernel(xc_ref, res_ref, w2_ref, b2_ref, w3_ref, b3_ref,
                           f1_ref, f2_ref, o_ref, *, taps, tap_stride):
    """Per-batch fused tail: 3x3 conv2 (kh taps accumulated from contiguous row
    slices) + BN2 + ReLU, conv3 + BN3, SE gate, channel scale, residual, ReLU."""
    hw, cexp = res_ref.shape
    cout = w2_ref.shape[2]

    # --- conv2: accumulate the kernel-height taps; each tap is a contiguous,
    #     sublane-aligned slice of the row-flattened padded activation. ---
    acc = jnp.zeros((hw, cout), jnp.float32)
    for t in range(taps):
        patch = xc_ref[pl.ds(t * tap_stride, hw), :]
        acc = acc + jnp.dot(patch, w2_ref[t], preferred_element_type=jnp.float32)
    out2 = jnp.maximum(acc + b2_ref[...], 0.0).astype(jnp.bfloat16)        # (HW, Cout)

    # --- conv3 + BN3 (stays in VMEM, never round-trips HBM) ---
    out3 = jnp.dot(out2, w3_ref[...], preferred_element_type=jnp.float32) + b3_ref[...]

    # --- SE: global avg pool -> FC -> ReLU -> FC -> sigmoid ---
    pooled = jnp.mean(out3, axis=0, keepdims=True).astype(jnp.bfloat16)    # (1, Cexp)
    h = jnp.maximum(
        jnp.dot(pooled, f1_ref[...], preferred_element_type=jnp.float32), 0.0)
    gate = jax.nn.sigmoid(
        jnp.dot(h.astype(jnp.bfloat16), f2_ref[...], preferred_element_type=jnp.float32))

    # --- channel scale + residual add + final ReLU ---
    o_ref[...] = jnp.maximum(out3 * gate + res_ref[...], 0.0).astype(o_ref.dtype)


def conv2_conv3_se_residual(xc, res, w2, b2, w3, b3, f1, f2, *, taps, tap_stride):
    """xc: (B, L, Kc) bf16 partial/full im2col of conv2 input (row-flattened);
    res: (B, HW, Cexp) f32 residual branch."""
    B, L, Kc = xc.shape
    HW, Cexp = res.shape[1], res.shape[2]
    Cout = w2.shape[2]
    Crp = f1.shape[1]
    kernel = functools.partial(_conv2_conv3_se_kernel, taps=taps, tap_stride=tap_stride)
    return pl.pallas_call(
        kernel,
        out_shape=jax.ShapeDtypeStruct((B, HW, Cexp), jnp.float32),
        grid=(B,),
        in_specs=[
            pl.BlockSpec((None, L, Kc), lambda b: (b, 0, 0)),
            pl.BlockSpec((None, HW, Cexp), lambda b: (b, 0, 0)),
            pl.BlockSpec((taps, Kc, Cout), lambda b: (0, 0, 0)),
            pl.BlockSpec((1, Cout), lambda b: (0, 0)),
            pl.BlockSpec((Cout, Cexp), lambda b: (0, 0)),
            pl.BlockSpec((1, Cexp), lambda b: (0, 0)),
            pl.BlockSpec((Cexp, Crp), lambda b: (0, 0)),
            pl.BlockSpec((Crp, Cexp), lambda b: (0, 0)),
        ],
        out_specs=pl.BlockSpec((None, HW, Cexp), lambda b: (b, 0, 0)),
        compiler_params=pltpu.CompilerParams(dimension_semantics=("parallel",)),
    )(xc, res, w2, b2, w3, b3, f1, f2)


# ------------------------------- JAX glue ----------------------------------


def se_bottleneck_forward(x_nchw, params, *, stride=1):
    B, Cin, H, W = x_nchw.shape
    Cout = params["w1"].shape[1]
    Cexp = params["w3"].shape[1]

    x = jnp.transpose(x_nchw, (0, 2, 3, 1))                 # NCHW -> NHWC (f32)
    x2d_bf = x.reshape(B * H * W, Cin).astype(jnp.bfloat16)

    need_down = (stride != 1) or (Cin != Cexp)
    Ho = (H - 1) // stride + 1
    Wo = (W - 1) // stride + 1

    # ---- conv1 + BN1 + ReLU, fused with downsample conv + BN when possible ----
    if need_down and stride == 1:
        wcat = jnp.concatenate([params["w1"], params["w_down"]], axis=1)
        bcat = jnp.concatenate([params["b1"], params["b_down"]], axis=1)
        y = matmul_bias(x2d_bf, wcat, bcat, relu_cols=Cout)  # (M, Cout + Cexp)
        out1 = y[:, :Cout]
        residual = y[:, Cout:].reshape(B, H * W, Cexp)
    else:
        out1 = matmul_bias(x2d_bf, params["w1"], params["b1"], relu_cols=Cout)
        if need_down:
            xs = x[:, ::stride, ::stride, :]
            res2d = matmul_bias(xs.reshape(B * Ho * Wo, Cin).astype(jnp.bfloat16),
                                params["w_down"], params["b_down"], relu_cols=0)
            residual = res2d.reshape(B, Ho * Wo, Cexp)
        else:
            residual = x.reshape(B, H * W, Cexp)            # identity shortcut

    # ---- conv2 (3x3, pad=1) input prep ----
    out1_nhwc = out1.reshape(B, H, W, Cout).astype(jnp.bfloat16)
    xp = jnp.pad(out1_nhwc, ((0, 0), (1, 1), (1, 1), (0, 0)))
    if stride == 1:
        # W-direction partial im2col only (3x channels); kh taps handled in-kernel
        # via contiguous row-block slices of the flattened (H+2)*Wo activation.
        cols = [xp[:, :, kw:kw + Wo, :] for kw in range(3)]
        xc = jnp.concatenate(cols, axis=-1).reshape(B, (H + 2) * Wo, 3 * Cout)
        taps, tap_stride = 3, Wo
        w2 = params["w2"]                                    # (3, 3*Cout, Cout)
    else:
        # Full im2col (9x channels); output spatial already stride^2 smaller.
        pats = [xp[:, kh:kh + stride * (Ho - 1) + 1:stride,
                   kw:kw + stride * (Wo - 1) + 1:stride, :]
                for kh in range(3) for kw in range(3)]
        xc = jnp.concatenate(pats, axis=-1).reshape(B, Ho * Wo, 9 * Cout)
        taps, tap_stride = 1, 0
        w2 = params["w2"].reshape(1, 9 * Cout, Cout)

    # ---- fused conv2+BN2+ReLU -> conv3+BN3 -> SE -> residual -> ReLU ----
    out = conv2_conv3_se_residual(
        xc, residual, w2, params["b2"], params["w3"], params["b3"],
        params["w_fc1"], params["w_fc2"], taps=taps, tap_stride=tap_stride)

    return jnp.transpose(out.reshape(B, Ho, Wo, Cexp), (0, 3, 1, 2))  # back to NCHW


# --------------------------------- main -------------------------------------


if __name__ == "__main__":
    key = jax.random.PRNGKey(0)
    B, Cin, H, W = 2, 16, 16, 16
    Cout, expansion, r, stride = 16, 4, 6, 1
    Cexp = expansion * Cout                      # 64
    Cr = Cexp // r                               # 10
    Crp = _round_up(Cr, 8)                       # pad SE hidden dim to sublane multiple
    eps = 1e-5

    ks = jax.random.split(key, 12)

    # Weights in PyTorch layout, then reordered / BN-folded for the kernels.
    w1_t = 0.1 * jax.random.normal(ks[0], (Cout, Cin), jnp.float32)          # conv1 (1x1)
    w2_t = 0.1 * jax.random.normal(ks[1], (Cout, Cout, 3, 3), jnp.float32)   # conv2 (3x3)
    w3_t = 0.1 * jax.random.normal(ks[2], (Cexp, Cout), jnp.float32)         # conv3 (1x1)
    wd_t = 0.1 * jax.random.normal(ks[3], (Cexp, Cin), jnp.float32)          # downsample
    fc1_t = 0.1 * jax.random.normal(ks[4], (Cr, Cexp), jnp.float32)          # SE fc1
    fc2_t = 0.1 * jax.random.normal(ks[5], (Cexp, Cr), jnp.float32)          # SE fc2

    def bn_raw(k, c):
        a, b, c_, d = jax.random.split(k, 4)
        gamma = 1.0 + 0.1 * jax.random.normal(a, (c,), jnp.float32)
        beta = 0.1 * jax.random.normal(b, (c,), jnp.float32)
        mean = 0.1 * jax.random.normal(c_, (c,), jnp.float32)
        var = 1.0 + 0.1 * jax.random.uniform(d, (c,), jnp.float32)
        return gamma, beta, mean, var

    def fold(bn):
        gamma, beta, mean, var = bn
        scale = gamma / jnp.sqrt(var + eps)
        return scale.reshape(1, -1), (beta - mean * scale).reshape(1, -1)

    bn1 = bn_raw(ks[6], Cout)
    bn2 = bn_raw(ks[7], Cout)
    bn3 = bn_raw(ks[8], Cexp)
    bnd = bn_raw(ks[9], Cexp)
    s1, b1 = fold(bn1)
    s2, b2 = fold(bn2)
    s3, b3 = fold(bn3)
    sd, bd = fold(bnd)

    # w2: (out,in,kh,kw) -> (kh, kw*in, out), matching the kw-folded activation layout.
    w2_r = jnp.transpose(w2_t, (2, 3, 1, 0)).reshape(3, 3 * Cout, Cout)

    params = {
        "w1": (w1_t.T * s1).astype(jnp.bfloat16),                 # (Cin, Cout), BN1 folded
        "b1": b1,
        "w2": (w2_r * s2).astype(jnp.bfloat16),                   # (3, 3*Cout, Cout), BN2 folded
        "b2": b2,
        "w3": (w3_t.T * s3).astype(jnp.bfloat16),                 # (Cout, Cexp), BN3 folded
        "b3": b3,
        "w_down": (wd_t.T * sd).astype(jnp.bfloat16),             # (Cin, Cexp), BNd folded
        "b_down": bd,
        "w_fc1": jnp.pad(fc1_t.T, ((0, 0), (0, Crp - Cr))).astype(jnp.bfloat16),  # (Cexp, Crp)
        "w_fc2": jnp.pad(fc2_t.T, ((0, Crp - Cr), (0, 0))).astype(jnp.bfloat16),  # (Crp, Cexp)
    }

    x = jax.random.normal(ks[10], (B, Cin, H, W), jnp.float32)

    fwd = jax.jit(functools.partial(se_bottleneck_forward, stride=stride))
    out = jax.block_until_ready(fwd(x, params))

    # ---- pure-JAX f32 reference (eval-mode BN, same semantics as the PyTorch module) ----
    def bn_apply(y, bn):
        gamma, beta, mean, var = bn
        inv = gamma / jnp.sqrt(var + eps)
        return y * inv[None, :, None, None] + (beta - mean * inv)[None, :, None, None]

    def conv(y, w, s=1, p=0):
        return jax.lax.conv_general_dilated(
            y, w, (s, s), [(p, p), (p, p)],
            dimension_numbers=("NCHW", "OIHW", "NCHW"),
            precision=jax.lax.Precision.HIGHEST)

    need_down = (stride != 1) or (Cin != Cexp)
    if need_down:
        residual_ref = bn_apply(conv(x, wd_t[:, :, None, None], s=stride), bnd)
    else:
        residual_ref = x
    o = jax.nn.relu(bn_apply(conv(x, w1_t[:, :, None, None]), bn1))
    o = jax.nn.relu(bn_apply(conv(o, w2_t, s=stride, p=1), bn2))
    o = bn_apply(conv(o, w3_t[:, :, None, None]), bn3)
    pooled = jnp.mean(o, axis=(2, 3))
    gate = jax.nn.sigmoid(jax.nn.relu(pooled @ fc1_t.T) @ fc2_t.T)
    ref = jax.nn.relu(o * gate[:, :, None, None] + residual_ref)

    assert out.shape == (B, Cexp, H // stride, W // stride), out.shape
    assert bool(jnp.all(jnp.isfinite(out)))
    assert bool(jnp.all(out >= 0.0))                         # final ReLU
    assert float(jnp.max(jnp.abs(out - ref))) < 1e-1         # bf16-MXU tolerance

    print("KERNEL_OK")
</pallas_src>

<mosaic_0001>
module attributes {stable_mosaic.version = 11 : i64} {
  func.func @_matmul_bias_kernel(%arg0: i32, %arg1: memref<512x16xbf16, #tpu.memory_space<vmem>>, %arg2: memref<16x80xbf16, #tpu.memory_space<vmem>>, %arg3: memref<1x80xf32, #tpu.memory_space<vmem>>, %arg4: memref<512x80xf32, #tpu.memory_space<vmem>>) attributes {dimension_semantics = [#tpu.dimension_semantics<parallel>], iteration_bounds = array<i64: 1>, scalar_prefetch = 0 : i64, scratch_operands = 0 : i64, tpu.core_type = #tpu.core_type<tc>, window_params = [{transform_indices = @transform_0, window_bounds = array<i64: 512, 16>}, {pipeline_mode = #tpu.pipeline_mode<synchronous>, transform_indices = @transform_1, window_bounds = array<i64: 16, 80>}, {pipeline_mode = #tpu.pipeline_mode<synchronous>, transform_indices = @transform_2, window_bounds = array<i64: 1, 80>}, {transform_indices = @transform_3, window_bounds = array<i64: 512, 80>}]} {
    %c0 = arith.constant 0 : index
    %c0_0 = arith.constant 0 : index
    %0 = vector.load %arg1[%c0, %c0_0] : memref<512x16xbf16, #tpu.memory_space<vmem>>, vector<512x16xbf16>
    %c0_1 = arith.constant 0 : index
    %c0_2 = arith.constant 0 : index
    %1 = vector.load %arg2[%c0_1, %c0_2] : memref<16x80xbf16, #tpu.memory_space<vmem>>, vector<16x80xbf16>
    %cst = arith.constant dense<0.000000e+00> : vector<512x80xf32>
    %2 = tpu.matmul %0, %1, %cst {dimension_numbers = #tpu.dot_dimension_numbers<[1], [0], [0], [1], [0, 0, 1, 1], [], []>} : vector<512x16xbf16>, vector<16x80xbf16>, vector<512x80xf32> -> vector<512x80xf32>
    %c0_3 = arith.constant 0 : index
    %c0_4 = arith.constant 0 : index
    %3 = vector.load %arg3[%c0_3, %c0_4] : memref<1x80xf32, #tpu.memory_space<vmem>>, vector<1x80xf32>
    %4 = vector.broadcast %3 : vector<1x80xf32> to vector<512x80xf32>
    %5 = arith.addf %2, %4 : vector<512x80xf32>
    %6 = tpu.iota {dimensions = array<i32: 1>} : vector<512x80xi32>
    %c16_i32 = arith.constant 16 : i32
    %7 = vector.broadcast %c16_i32 : i32 to vector<512x80xi32>
    %8 = arith.cmpi slt, %6, %7 : vector<512x80xi32>
    %cst_5 = arith.constant 0.000000e+00 : f32
    %9 = vector.broadcast %cst_5 : f32 to vector<512x80xf32>
    %10 = arith.maximumf %5, %9 : vector<512x80xf32>
    %11 = arith.select %8, %10, %5 : vector<512x80xi1>, vector<512x80xf32>
    %c0_6 = arith.constant 0 : index
    %c0_7 = arith.constant 0 : index
    %12 = vector.load %arg4[%c0_6, %c0_7] : memref<512x80xf32, #tpu.memory_space<vmem>>, vector<512x80xf32>
    tpu.vector_store %arg4[%c0_6, %c0_7], %11 {strides = array<i32>} : memref<512x80xf32, #tpu.memory_space<vmem>>, vector<512x80xf32>,
    return
  }
  func.func @transform_0(%arg0: i32) -> (i32, i32) {
    %c0_i32 = arith.constant 0 : i32
    %c0_i32_0 = arith.constant 0 : i32
    return %arg0, %c0_i32 : i32, i32
  }
  func.func @transform_1(%arg0: i32) -> (i32, i32) {
    %c0_i32 = arith.constant 0 : i32
    %c0_i32_0 = arith.constant 0 : i32
    %c0_i32_1 = arith.constant 0 : i32
    return %c0_i32, %c0_i32_0 : i32, i32
  }
  func.func @transform_2(%arg0: i32) -> (i32, i32) {
    %c0_i32 = arith.constant 0 : i32
    %c0_i32_0 = arith.constant 0 : i32
    %c0_i32_1 = arith.constant 0 : i32
    return %c0_i32, %c0_i32_0 : i32, i32
  }
  func.func @transform_3(%arg0: i32) -> (i32, i32) {
    %c0_i32 = arith.constant 0 : i32
    %c0_i32_0 = arith.constant 0 : i32
    return %arg0, %c0_i32 : i32, i32
  }
}

module attributes {stable_mosaic.version = 11 : i64} {
  func.func @_conv2_conv3_se_kernel(%arg0: i32, %arg1: memref<1x288x48xbf16, #tpu.memory_space<vmem>>, %arg2: memref<1x256x64xf32, #tpu.memory_space<vmem>>, %arg3: memref<3x48x16xbf16, #tpu.memory_space<vmem>>, %arg4: memref<1x16xf32, #tpu.memory_space<vmem>>, %arg5: memref<16x64xbf16, #tpu.memory_space<vmem>>, %arg6: memref<1x64xf32, #tpu.memory_space<vmem>>, %arg7: memref<64x16xbf16, #tpu.memory_space<vmem>>, %arg8: memref<16x64xbf16, #tpu.memory_space<vmem>>, %arg9: memref<1x256x64xf32, #tpu.memory_space<vmem>>) attributes {dimension_semantics = [#tpu.dimension_semantics<parallel>], iteration_bounds = array<i64: 2>, scalar_prefetch = 0 : i64, scratch_operands = 0 : i64, tpu.core_type = #tpu.core_type<tc>, window_params = [{transform_indices = @transform_0, window_bounds = array<i64: 1, 288, 48>}, {transform_indices = @transform_1, window_bounds = array<i64: 1, 256, 64>}, {pipeline_mode = #tpu.pipeline_mode<synchronous>, transform_indices = @transform_2, window_bounds = array<i64: 3, 48, 16>}, {pipeline_mode = #tpu.pipeline_mode<synchronous>, transform_indices = @transform_3, window_bounds = array<i64: 1, 16>}, {pipeline_mode = #tpu.pipeline_mode<synchronous>, transform_indices = @transform_4, window_bounds = array<i64: 16, 64>}, {pipeline_mode = #tpu.pipeline_mode<synchronous>, transform_indices = @transform_5, window_bounds = array<i64: 1, 64>}, {pipeline_mode = #tpu.pipeline_mode<synchronous>, transform_indices = @transform_6, window_bounds = array<i64: 64, 16>}, {pipeline_mode = #tpu.pipeline_mode<synchronous>, transform_indices = @transform_7, window_bounds = array<i64: 16, 64>}, {transform_indices = @transform_8, window_bounds = array<i64: 1, 256, 64>}]} {
    %cst = arith.constant 0.000000e+00 : f32
    %0 = vector.broadcast %cst : f32 to vector<256x16xf32>
    %c0 = arith.constant 0 : index
    %c0_0 = arith.constant 0 : index
    %c0_1 = arith.constant 0 : index
    %1 = vector.load %arg1[%c0, %c0_0, %c0_1] : memref<1x288x48xbf16, #tpu.memory_space<vmem>>, vector<1x256x48xbf16>
    %2 = vector.shape_cast %1 : vector<1x256x48xbf16> to vector<256x48xbf16>
    %c0_2 = arith.constant 0 : index
    %c0_3 = arith.constant 0 : index
    %c0_4 = arith.constant 0 : index
    %3 = vector.load %arg3[%c0_2, %c0_3, %c0_4] : memref<3x48x16xbf16, #tpu.memory_space<vmem>>, vector<1x48x16xbf16>
    %4 = vector.shape_cast %3 : vector<1x48x16xbf16> to vector<48x16xbf16>
    %cst_5 = arith.constant dense<0.000000e+00> : vector<256x16xf32>
    %5 = tpu.matmul %2, %4, %cst_5 {dimension_numbers = #tpu.dot_dimension_numbers<[1], [0], [0], [1], [0, 0, 1, 1], [], []>} : vector<256x48xbf16>, vector<48x16xbf16>, vector<256x16xf32> -> vector<256x16xf32>
    %6 = arith.addf %0, %5 : vector<256x16xf32>
    %c0_6 = arith.constant 0 : index
    %c16 = arith.constant 16 : index
    %c0_7 = arith.constant 0 : index
    %7 = vector.load %arg1[%c0_6, %c16, %c0_7] : memref<1x288x48xbf16, #tpu.memory_space<vmem>>, vector<1x256x48xbf16>
    %8 = vector.shape_cast %7 : vector<1x256x48xbf16> to vector<256x48xbf16>
    %c1 = arith.constant 1 : index
    %c0_8 = arith.constant 0 : index
    %c0_9 = arith.constant 0 : index
    %9 = vector.load %arg3[%c1, %c0_8, %c0_9] : memref<3x48x16xbf16, #tpu.memory_space<vmem>>, vector<1x48x16xbf16>
    %10 = vector.shape_cast %9 : vector<1x48x16xbf16> to vector<48x16xbf16>
    %cst_10 = arith.constant dense<0.000000e+00> : vector<256x16xf32>
    %11 = tpu.matmul %8, %10, %cst_10 {dimension_numbers = #tpu.dot_dimension_numbers<[1], [0], [0], [1], [0, 0, 1, 1], [], []>} : vector<256x48xbf16>, vector<48x16xbf16>, vector<256x16xf32> -> vector<256x16xf32>
    %12 = arith.addf %6, %11 : vector<256x16xf32>
    %c0_11 = arith.constant 0 : index
    %c32 = arith.constant 32 : index
    %c0_12 = arith.constant 0 : index
    %13 = vector.load %arg1[%c0_11, %c32, %c0_12] : memref<1x288x48xbf16, #tpu.memory_space<vmem>>, vector<1x256x48xbf16>
    %14 = vector.shape_cast %13 : vector<1x256x48xbf16> to vector<256x48xbf16>
    %c2 = arith.constant 2 : index
    %c0_13 = arith.constant 0 : index
    %c0_14 = arith.constant 0 : index
    %15 = vector.load %arg3[%c2, %c0_13, %c0_14] : memref<3x48x16xbf16, #tpu.memory_space<vmem>>, vector<1x48x16xbf16>
    %16 = vector.shape_cast %15 : vector<1x48x16xbf16> to vector<48x16xbf16>
    %cst_15 = arith.constant dense<0.000000e+00> : vector<256x16xf32>
    %17 = tpu.matmul %14, %16, %cst_15 {dimension_numbers = #tpu.dot_dimension_numbers<[1], [0], [0], [1], [0, 0, 1, 1], [], []>} : vector<256x48xbf16>, vector<48x16xbf16>, vector<256x16xf32> -> vector<256x16xf32>
    %18 = arith.addf %12, %17 : vector<256x16xf32>
    %c0_16 = arith.constant 0 : index
    %c0_17 = arith.constant 0 : index
    %19 = vector.load %arg4[%c0_16, %c0_17] : memref<1x16xf32, #tpu.memory_space<vmem>>, vector<1x16xf32>
    %20 = vector.broadcast %19 : vector<1x16xf32> to vector<256x16xf32>
    %21 = arith.addf %18, %20 : vector<256x16xf32>
    %cst_18 = arith.constant 0.000000e+00 : f32
    %22 = vector.broadcast %cst_18 : f32 to vector<256x16xf32>
    %23 = arith.maximumf %21, %22 : vector<256x16xf32>
    %24 = arith.truncf %23 : vector<256x16xf32> to vector<256x16xbf16>
    %c0_19 = arith.constant 0 : index
    %c0_20 = arith.constant 0 : index
    %25 = vector.load %arg5[%c0_19, %c0_20] : memref<16x64xbf16, #tpu.memory_space<vmem>>, vector<16x64xbf16>
    %cst_21 = arith.constant dense<0.000000e+00> : vector<256x64xf32>
    %26 = tpu.matmul %24, %25, %cst_21 {dimension_numbers = #tpu.dot_dimension_numbers<[1], [0], [0], [1], [0, 0, 1, 1], [], []>} : vector<256x16xbf16>, vector<16x64xbf16>, vector<256x64xf32> -> vector<256x64xf32>
    %c0_22 = arith.constant 0 : index
    %c0_23 = arith.constant 0 : index
    %27 = vector.load %arg6[%c0_22, %c0_23] : memref<1x64xf32, #tpu.memory_space<vmem>>, vector<1x64xf32>
    %28 = vector.broadcast %27 : vector<1x64xf32> to vector<256x64xf32>
    %29 = arith.addf %26, %28 : vector<256x64xf32>
    %cst_24 = arith.constant dense<0.000000e+00> : vector<64xf32>
    %30 = vector.multi_reduction <add>, %29, %cst_24 [0] : vector<256x64xf32> to vector<64xf32>
    %31 = vector.shape_cast %30 : vector<64xf32> to vector<1x64xf32>
    %cst_25 = arith.constant 2.560000e+02 : f32
    %32 = vector.broadcast %cst_25 : f32 to vector<1x64xf32>
    %33 = arith.divf %31, %32 : vector<1x64xf32>
    %34 = arith.truncf %33 : vector<1x64xf32> to vector<1x64xbf16>
    %c0_26 = arith.constant 0 : index
    %c0_27 = arith.constant 0 : index
    %35 = vector.load %arg7[%c0_26, %c0_27] : memref<64x16xbf16, #tpu.memory_space<vmem>>, vector<64x16xbf16>
    %cst_28 = arith.constant dense<0.000000e+00> : vector<1x16xf32>
    %36 = tpu.matmul %34, %35, %cst_28 {dimension_numbers = #tpu.dot_dimension_numbers<[1], [0], [0], [1], [0, 0, 1, 1], [], []>} : vector<1x64xbf16>, vector<64x16xbf16>, vector<1x16xf32> -> vector<1x16xf32>
    %cst_29 = arith.constant 0.000000e+00 : f32
    %37 = vector.broadcast %cst_29 : f32 to vector<1x16xf32>
    %38 = arith.maximumf %36, %37 : vector<1x16xf32>
    %39 = arith.truncf %38 : vector<1x16xf32> to vector<1x16xbf16>
    %c0_30 = arith.constant 0 : index
    %c0_31 = arith.constant 0 : index
    %40 = vector.load %arg8[%c0_30, %c0_31] : memref<16x64xbf16, #tpu.memory_space<vmem>>, vector<16x64xbf16>
    %cst_32 = arith.constant dense<0.000000e+00> : vector<1x64xf32>
    %41 = tpu.matmul %39, %40, %cst_32 {dimension_numbers = #tpu.dot_dimension_numbers<[1], [0], [0], [1], [0, 0, 1, 1], [], []>} : vector<1x16xbf16>, vector<16x64xbf16>, vector<1x64xf32> -> vector<1x64xf32>
    %42 = arith.negf %41 : vector<1x64xf32>
    %43 = math.exp %42 : vector<1x64xf32>
    %cst_33 = arith.constant 1.000000e+00 : f32
    %44 = vector.broadcast %cst_33 : f32 to vector<1x64xf32>
    %45 = arith.addf %44, %43 : vector<1x64xf32>
    %46 = arith.divf %44, %45 : vector<1x64xf32>
    %47 = vector.broadcast %46 : vector<1x64xf32> to vector<256x64xf32>
    %48 = arith.mulf %29, %47 : vector<256x64xf32>
    %c0_34 = arith.constant 0 : index
    %c0_35 = arith.constant 0 : index
    %c0_36 = arith.constant 0 : index
    %49 = vector.load %arg2[%c0_34, %c0_35, %c0_36] : memref<1x256x64xf32, #tpu.memory_space<vmem>>, vector<1x256x64xf32>
    %50 = vector.shape_cast %49 : vector<1x256x64xf32> to vector<256x64xf32>
    %51 = arith.addf %48, %50 : vector<256x64xf32>
    %cst_37 = arith.constant 0.000000e+00 : f32
    %52 = vector.broadcast %cst_37 : f32 to vector<256x64xf32>
    %53 = arith.maximumf %51, %52 : vector<256x64xf32>
    %c0_38 = arith.constant 0 : index
    %c0_39 = arith.constant 0 : index
    %c0_40 = arith.constant 0 : index
    %54 = vector.load %arg9[%c0_38, %c0_39, %c0_40] : memref<1x256x64xf32, #tpu.memory_space<vmem>>, vector<1x256x64xf32>
    %55 = vector.shape_cast %54 : vector<1x256x64xf32> to vector<256x64xf32>
    %56 = vector.shape_cast %53 : vector<256x64xf32> to vector<1x256x64xf32>
    tpu.vector_store %arg9[%c0_38, %c0_39, %c0_40], %56 {strides = array<i32>} : memref<1x256x64xf32, #tpu.memory_space<vmem>>, vector<1x256x64xf32>,
    return
  }
  func.func @transform_0(%arg0: i32) -> (i32, i32, i32) {
    %c0_i32 = arith.constant 0 : i32
    %c0_i32_0 = arith.constant 0 : i32
    %c0_i32_1 = arith.constant 0 : i32
    return %arg0, %c0_i32, %c0_i32_0 : i32, i32, i32
  }
  func.func @transform_1(%arg0: i32) -> (i32, i32, i32) {
    %c0_i32 = arith.constant 0 : i32
    %c0_i32_0 = arith.constant 0 : i32
    %c0_i32_1 = arith.constant 0 : i32
    return %arg0, %c0_i32, %c0_i32_0 : i32, i32, i32
  }
  func.func @transform_2(%arg0: i32) -> (i32, i32, i32) {
    %c0_i32 = arith.constant 0 : i32
    %c0_i32_0 = arith.constant 0 : i32
    %c0_i32_1 = arith.constant 0 : i32
    %c0_i32_2 = arith.constant 0 : i32
    return %c0_i32, %c0_i32_0, %c0_i32_1 : i32, i32, i32
  }
  func.func @transform_3(%arg0: i32) -> (i32, i32) {
    %c0_i32 = arith.constant 0 : i32
    %c0_i32_0 = arith.constant 0 : i32
    %c0_i32_1 = arith.constant 0 : i32
    return %c0_i32, %c0_i32_0 : i32, i32
  }
  func.func @transform_4(%arg0: i32) -> (i32, i32) {
    %c0_i32 = arith.constant 0 : i32
    %c0_i32_0 = arith.constant 0 : i32
    %c0_i32_1 = arith.constant 0 : i32
    return %c0_i32, %c0_i32_0 : i32, i32
  }
  func.func @transform_5(%arg0: i32) -> (i32, i32) {
    %c0_i32 = arith.constant 0 : i32
    %c0_i32_0 = arith.constant 0 : i32
    %c0_i32_1 = arith.constant 0 : i32
    return %c0_i32, %c0_i32_0 : i32, i32
  }
  func.func @transform_6(%arg0: i32) -> (i32, i32) {
    %c0_i32 = arith.constant 0 : i32
    %c0_i32_0 = arith.constant 0 : i32
    %c0_i32_1 = arith.constant 0 : i32
    return %c0_i32, %c0_i32_0 : i32, i32
  }
  func.func @transform_7(%arg0: i32) -> (i32, i32) {
    %c0_i32 = arith.constant 0 : i32
    %c0_i32_0 = arith.constant 0 : i32
    %c0_i32_1 = arith.constant 0 : i32
    return %c0_i32, %c0_i32_0 : i32, i32
  }
  func.func @transform_8(%arg0: i32) -> (i32, i32, i32) {
    %c0_i32 = arith.constant 0 : i32
    %c0_i32_0 = arith.constant 0 : i32
    %c0_i32_1 = arith.constant 0 : i32
    return %arg0, %c0_i32, %c0_i32_0 : i32, i32, i32
  }
}

</mosaic_0001>

<llo_original>
// kernel: se_bottleneck_forward.2
$region0: #{se_bottleneck_forward.2}
  #allocation0 [shape = 'u32[]', space=smem, size = 0x4, offset = 0x4, fixed_abs, tag = 'smem constant byte address 0x4 - core index']
  #allocation1 [shape = 'u32[144,128]{1,0:T(1,128)}', space=vmem, size = 0x12000, scoped, tag = 'internal scratch']
  %s0 = inlined_call_operand.vmem [shape: bf16[512,16], index: 0, kind: input, shape index: {}]
  %s1 = inlined_call_operand.vmem [shape: bf16[16,80], index: 1, kind: input, shape index: {}]
  %s2 = inlined_call_operand.vmem [shape: f32[1,80], index: 2, kind: input, shape index: {}]
  %s3 = inlined_call_operand.vmem [shape: f32[512,80], index: 3, kind: output, shape index: {}]
  %s4 = sld [smem:[#allocation0]]
  $region22: #{se_bottleneck_forward.2} parent=0
    _
  %s6 = ssub.s32 1, %s4
  %s7 = scalar_select 0, %s6, %s4
  // Predicated region
  $region2: #{se_bottleneck_forward.2} parent=0 // pred_check
    _
  $region3: #{se_bottleneck_forward.2} parent=0 // pred_check_branch
    %9 = sbr.rel (0) target = $region5
  $region4: #{se_bottleneck_forward.2} parent=0 // pred_region
    _
  $region5: #{se_bottleneck_forward.2} parent=0 // pred_fallthru
    _
  // Predicated region
  $region6: #{se_bottleneck_forward.2} parent=0 // pred_check
    _
  $region7: #{se_bottleneck_forward.2} parent=0 // pred_check_branch
    %11 = sbr.rel (0) target = $region9
  $region8: #{se_bottleneck_forward.2} parent=0 // pred_region
    _
  $region9: #{se_bottleneck_forward.2} parent=0 // pred_fallthru
    _
  // Predicated region
  $region10: #{se_bottleneck_forward.2} parent=0 // pred_check
    _
  $region11: #{se_bottleneck_forward.2} parent=0 // pred_check_branch
    %13 = sbr.rel (0) target = $region13
  $region12: #{se_bottleneck_forward.2} parent=0 // pred_region
    _
  $region13: #{se_bottleneck_forward.2} parent=0 // pred_fallthru
    _
  %v15 = vld [vmem:[%s0] sm:$0xf]
  %v16 = vld [vmem:[%s0 + $0x4] sm:$0xf]
  %v17 = vld [vmem:[%s0 + $0x8] sm:$0xf]
  %v18 = vld [vmem:[%s0 + $0xc] sm:$0xf]
  %v19 = vld [vmem:[%s0 + $0x10] sm:$0xf]
  %v20 = vld [vmem:[%s0 + $0x14] sm:$0xf]
  %v21 = vld [vmem:[%s0 + $0x18] sm:$0xf]
  %v22 = vld [vmem:[%s0 + $0x1c] sm:$0xf]
  %v23 = vld [vmem:[%s0 + $0x20] sm:$0xf]
  %v24 = vld [vmem:[%s0 + $0x24] sm:$0xf]
  %v25 = vld [vmem:[%s0 + $0x28] sm:$0xf]
  %v26 = vld [vmem:[%s0 + $0x2c] sm:$0xf]
  %v27 = vld [vmem:[%s0 + $0x30] sm:$0xf]
  %v28 = vld [vmem:[%s0 + $0x34] sm:$0xf]
  %v29 = vld [vmem:[%s0 + $0x38] sm:$0xf]
  %v30 = vld [vmem:[%s0 + $0x3c] sm:$0xf]
  %v31 = vld [vmem:[%s0 + $0x40] sm:$0xf]
  %v32 = vld [vmem:[%s0 + $0x44] sm:$0xf]
  %v33 = vld [vmem:[%s0 + $0x48] sm:$0xf]
  %v34 = vld [vmem:[%s0 + $0x4c] sm:$0xf]
  %v35 = vld [vmem:[%s0 + $0x50] sm:$0xf]
  %v36 = vld [vmem:[%s0 + $0x54] sm:$0xf]
  %v37 = vld [vmem:[%s0 + $0x58] sm:$0xf]
  %v38 = vld [vmem:[%s0 + $0x5c] sm:$0xf]
  %v39 = vld [vmem:[%s0 + $0x60] sm:$0xf]
  %v40 = vld [vmem:[%s0 + $0x64] sm:$0xf]
  %v41 = vld [vmem:[%s0 + $0x68] sm:$0xf]
  %v42 = vld [vmem:[%s0 + $0x6c] sm:$0xf]
  %v43 = vld [vmem:[%s0 + $0x70] sm:$0xf]
  %v44 = vld [vmem:[%s0 + $0x74] sm:$0xf]
  %v45 = vld [vmem:[%s0 + $0x78] sm:$0xf]
  %v46 = vld [vmem:[%s0 + $0x7c] sm:$0xf]
  %v47 = vld [vmem:[%s0 + $0x80] sm:$0xf]
  %v48 = vld [vmem:[%s0 + $0x84] sm:$0xf]
  %v49 = vld [vmem:[%s0 + $0x88] sm:$0xf]
  %v50 = vld [vmem:[%s0 + $0x8c] sm:$0xf]
  %v51 = vld [vmem:[%s0 + $0x90] sm:$0xf]
  %v52 = vld [vmem:[%s0 + $0x94] sm:$0xf]
  %v53 = vld [vmem:[%s0 + $0x98] sm:$0xf]
  %v54 = vld [vmem:[%s0 + $0x9c] sm:$0xf]
  %v55 = vld [vmem:[%s0 + $0xa0] sm:$0xf]
  %v56 = vld [vmem:[%s0 + $0xa4] sm:$0xf]
  %v57 = vld [vmem:[%s0 + $0xa8] sm:$0xf]
  %v58 = vld [vmem:[%s0 + $0xac] sm:$0xf]
  %v59 = vld [vmem:[%s0 + $0xb0] sm:$0xf]
  %v60 = vld [vmem:[%s0 + $0xb4] sm:$0xf]
  %v61 = vld [vmem:[%s0 + $0xb8] sm:$0xf]
  %v62 = vld [vmem:[%s0 + $0xbc] sm:$0xf]
  %v63 = vld [vmem:[%s0 + $0xc0] sm:$0xf]
  %v64 = vld [vmem:[%s0 + $0xc4] sm:$0xf]
  %v65 = vld [vmem:[%s0 + $0xc8] sm:$0xf]
  %v66 = vld [vmem:[%s0 + $0xcc] sm:$0xf]
  %v67 = vld [vmem:[%s0 + $0xd0] sm:$0xf]
  %v68 = vld [vmem:[%s0 + $0xd4] sm:$0xf]
  %v69 = vld [vmem:[%s0 + $0xd8] sm:$0xf]
  %v70 = vld [vmem:[%s0 + $0xdc] sm:$0xf]
  %v71 = vld [vmem:[%s0 + $0xe0] sm:$0xf]
  %v72 = vld [vmem:[%s0 + $0xe4] sm:$0xf]
  %v73 = vld [vmem:[%s0 + $0xe8] sm:$0xf]
  %v74 = vld [vmem:[%s0 + $0xec] sm:$0xf]
  %v75 = vld [vmem:[%s0 + $0xf0] sm:$0xf]
  %v76 = vld [vmem:[%s0 + $0xf4] sm:$0xf]
  %v77 = vld [vmem:[%s0 + $0xf8] sm:$0xf]
  %v78 = vld [vmem:[%s0 + $0xfc] sm:$0xf]
  %v79 = vld [vmem:[%s1] sm:$0xf]
  %v80 = vld [vmem:[%s1 + $0x4] sm:$0xf]
  %v81 = vld [vmem:[%s2] sm:$0x1]
  %v83 = vlaneseq
  %v84 = vshrl.u32 %v83, 7
  %v85 = vsub.s32 0, %v84
  %v86 = vrot.slane %v81, %v85
  %v152 = vunpack.c.l.b16 %v15
  %v153 = vunpack.c.l.b16 %v16
  %v154 = vunpack.c.l.b16 %v17
  %v155 = vunpack.c.l.b16 %v18
  %v156 = vunpack.c.l.b16 %v19
  %v157 = vunpack.c.l.b16 %v20
  %v158 = vunpack.c.l.b16 %v21
  %v159 = vunpack.c.l.b16 %v22
  %v160 = vunpack.c.l.b16 %v23
  %v161 = vunpack.c.l.b16 %v24
  %v162 = vunpack.c.l.b16 %v25
  %v163 = vunpack.c.l.b16 %v26
  %v164 = vunpack.c.l.b16 %v27
  %v165 = vunpack.c.l.b16 %v28
  %v166 = vunpack.c.l.b16 %v29
  %v167 = vunpack.c.l.b16 %v30
  %v168 = vunpack.c.l.b16 %v31
  %v169 = vunpack.c.l.b16 %v32
  %v170 = vunpack.c.l.b16 %v33
  %v171 = vunpack.c.l.b16 %v34
  %v172 = vunpack.c.l.b16 %v35
  %v173 = vunpack.c.l.b16 %v36
  %v174 = vunpack.c.l.b16 %v37
  %v175 = vunpack.c.l.b16 %v38
  %v176 = vunpack.c.l.b16 %v39
  %v177 = vunpack.c.l.b16 %v40
  %v178 = vunpack.c.l.b16 %v41
  %v179 = vunpack.c.l.b16 %v42
  %v180 = vunpack.c.l.b16 %v43
  %v181 = vunpack.c.l.b16 %v44
  %v182 = vunpack.c.l.b16 %v45
  %v183 = vunpack.c.l.b16 %v46
  %v184 = vunpack.c.l.b16 %v47
  %v185 = vunpack.c.l.b16 %v48
  %v186 = vunpack.c.l.b16 %v49
  %v187 = vunpack.c.l.b16 %v50
  %v188 = vunpack.c.l.b16 %v51
  %v189 = vunpack.c.l.b16 %v52
  %v190 = vunpack.c.l.b16 %v53
  %v191 = vunpack.c.l.b16 %v54
  %v192 = vunpack.c.l.b16 %v55
  %v193 = vunpack.c.l.b16 %v56
  %v194 = vunpack.c.l.b16 %v57
  %v195 = vunpack.c.l.b16 %v58
  %v196 = vunpack.c.l.b16 %v59
  %v197 = vunpack.c.l.b16 %v60
  %v198 = vunpack.c.l.b16 %v61
  %v199 = vunpack.c.l.b16 %v62
  %v200 = vunpack.c.l.b16 %v63
  %v201 = vunpack.c.l.b16 %v64
  %v202 = vunpack.c.l.b16 %v65
  %v203 = vunpack.c.l.b16 %v66
  %v204 = vunpack.c.l.b16 %v67
  %v205 = vunpack.c.l.b16 %v68
  %v206 = vunpack.c.l.b16 %v69
  %v207 = vunpack.c.l.b16 %v70
  %v208 = vunpack.c.l.b16 %v71
  %v209 = vunpack.c.l.b16 %v72
  %v210 = vunpack.c.l.b16 %v73
  %v211 = vunpack.c.l.b16 %v74
  %v212 = vunpack.c.l.b16 %v75
  %v213 = vunpack.c.l.b16 %v76
  %v214 = vunpack.c.l.b16 %v77
  %v215 = vunpack.c.l.b16 %v78
  %v216 = vpack.c.b16 %v153, %v152
  %v217 = vpack.c.b16 %v155, %v154
  %v218 = vpack.c.b16 %v157, %v156
  %v219 = vpack.c.b16 %v159, %v158
  %v220 = vpack.c.b16 %v161, %v160
  %v221 = vpack.c.b16 %v163, %v162
  %v222 = vpack.c.b16 %v165, %v164
  %v223 = vpack.c.b16 %v167, %v166
  %v224 = vpack.c.b16 %v169, %v168
  %v225 = vpack.c.b16 %v171, %v170
  %v226 = vpack.c.b16 %v173, %v172
  %v227 = vpack.c.b16 %v175, %v174
  %v228 = vpack.c.b16 %v177, %v176
  %v229 = vpack.c.b16 %v179, %v178
  %v230 = vpack.c.b16 %v181, %v180
  %v231 = vpack.c.b16 %v183, %v182
  %v232 = vpack.c.b16 %v185, %v184
  %v233 = vpack.c.b16 %v187, %v186
  %v234 = vpack.c.b16 %v189, %v188
  %v235 = vpack.c.b16 %v191, %v190
  %v236 = vpack.c.b16 %v193, %v192
  %v237 = vpack.c.b16 %v195, %v194
  %v238 = vpack.c.b16 %v197, %v196
  %v239 = vpack.c.b16 %v199, %v198
  %v240 = vpack.c.b16 %v201, %v200
  %v241 = vpack.c.b16 %v203, %v202
  %v242 = vpack.c.b16 %v205, %v204
  %v243 = vpack.c.b16 %v207, %v206
  %v244 = vpack.c.b16 %v209, %v208
  %v245 = vpack.c.b16 %v211, %v210
  %v246 = vpack.c.b16 %v213, %v212
  %v247 = vpack.c.b16 %v215, %v214
  %v250 = vunpack.c.l.b16 %v79
  %v251 = vunpack.c.l.b16 %v80
  %v252 = vpack.c.b16 %v251, %v250
  %vm254 = vcmask 130048
  %v256 = vsel %vm254, %v216, 0
  %v259 = vsel %vm254, %v217, 0
  %v262 = vsel %vm254, %v218, 0
  %v265 = vsel %vm254, %v219, 0
  %v268 = vsel %vm254, %v220, 0
  %v271 = vsel %vm254, %v221, 0
  %v274 = vsel %vm254, %v222, 0
  %v277 = vsel %vm254, %v223, 0
  %v280 = vsel %vm254, %v224, 0
  %v283 = vsel %vm254, %v225, 0
  %v286 = vsel %vm254, %v226, 0
  %v289 = vsel %vm254, %v227, 0
  %v292 = vsel %vm254, %v228, 0
  %v295 = vsel %vm254, %v229, 0
  %v298 = vsel %vm254, %v230, 0
  %v301 = vsel %vm254, %v231, 0
  %v304 = vsel %vm254, %v232, 0
  %v307 = vsel %vm254, %v233, 0
  %v310 = vsel %vm254, %v234, 0
  %v313 = vsel %vm254, %v235, 0
  %v316 = vsel %vm254, %v236, 0
  %v319 = vsel %vm254, %v237, 0
  %v322 = vsel %vm254, %v238, 0
  %v325 = vsel %vm254, %v239, 0
  %v328 = vsel %vm254, %v240, 0
  %v331 = vsel %vm254, %v241, 0
  %v334 = vsel %vm254, %v242, 0
  %v337 = vsel %vm254, %v243, 0
  %v340 = vsel %vm254, %v244, 0
  %v343 = vsel %vm254, %v245, 0
  %v346 = vsel %vm254, %v246, 0
  %v349 = vsel %vm254, %v247, 0
  %351 = vmatprep.subr.bf16.mxu0 0
  %352 = vmatpush1.bf16.msra.mxu0 0
  %353 = vmatprep.subr.bf16.mxu0 0
  %354 = vmatpush1.bf16.msra.mxu0 0
  %355 = vmatprep.subr.bf16.mxu0 0
  %356 = vmatpush1.bf16.msra.mxu0 0
  %357 = vmatprep.subr.bf16.mxu0 0
  %358 = vmatpush1.bf16.msra.mxu0 0
  %359 = vmatprep.subr.bf16.mxu0 0
  %360 = vmatpush1.bf16.msra.mxu0 0
  %361 = vmatprep.subr.bf16.mxu0 0
  %362 = vmatpush1.bf16.msra.mxu0 0
  %363 = vmatprep.subr.bf16.mxu0 0
  %364 = vmatpush1.bf16.msra.mxu0 0
  %365 = vmatprep.subr.bf16.mxu0 0
  %366 = vmatpush1.bf16.msra.mxu0 %v252
  %367 = vmatprep.subr.bf16.mxu0 0
  %368 = vmatpush2.bf16.msra.mxu0 0
  %369 = vmatprep.subr.bf16.mxu0 0
  %370 = vmatpush2.bf16.msra.mxu0 0
  %371 = vmatprep.subr.bf16.mxu0 0
  %372 = vmatpush2.bf16.msra.mxu0 0
  %373 = vmatprep.subr.bf16.mxu0 0
  %374 = vmatpush2.bf16.msra.mxu0 0
  %375 = vmatprep.subr.bf16.mxu0 0
  %376 = vmatpush2.bf16.msra.mxu0 0
  %377 = vmatprep.subr.bf16.mxu0 0
  %378 = vmatpush2.bf16.msra.mxu0 0
  %379 = vmatprep.subr.bf16.mxu0 0
  %380 = vmatpush2.bf16.msra.mxu0 0
  %381 = vmatprep.subr.bf16.mxu0 0
  %382 = vmatpush2.bf16.msra.mxu0 0
  %383 = vmatprep.mubr.bf16.mxu0 0
  %384 = vmatmul.mubr.bf16.gmra.mxu0 %v256
  %v385 = vpop.f32.mrf.mxu0
  %v386 = vadd.f32 %v86, %v385
  %v387 = vpop.f32.mrf.mxu0
  %v388 = vpop.f32.mrf.mxu0
  %v389 = vadd.f32 %v86, %v388
  %v390 = vpop.f32.mrf.mxu0
  %391 = vmatprep.mubr.bf16.mxu0 0
  %392 = vmatmul.mubr.bf16.gmra.mxu0 %v259
  %v393 = vpop.f32.mrf.mxu0
  %v394 = vadd.f32 %v86, %v393
  %v395 = vpop.f32.mrf.mxu0
  %v396 = vpop.f32.mrf.mxu0
  %v397 = vadd.f32 %v86, %v396
  %v398 = vpop.f32.mrf.mxu0
  %399 = vmatprep.mubr.bf16.mxu0 0
  %400 = vmatmul.mubr.bf16.gmra.mxu0 %v262
  %v401 = vpop.f32.mrf.mxu0
  %v402 = vadd.f32 %v86, %v401
  %v403 = vpop.f32.mrf.mxu0
  %v404 = vpop.f32.mrf.mxu0
  %v405 = vadd.f32 %v86, %v404
  %v406 = vpop.f32.mrf.mxu0
  %407 = vmatprep.mubr.bf16.mxu0 0
  %408 = vmatmul.mubr.bf16.gmra.mxu0 %v265
  %v409 = vpop.f32.mrf.mxu0
  %v410 = vadd.f32 %v86, %v409
  %v411 = vpop.f32.mrf.mxu0
  %v412 = vpop.f32.mrf.mxu0
  %v413 = vadd.f32 %v86, %v412
  %v414 = vpop.f32.mrf.mxu0
  %415 = vmatprep.mubr.bf16.mxu0 0
  %416 = vmatmul.mubr.bf16.gmra.mxu0 %v268
  %v417 = vpop.f32.mrf.mxu0
  %v418 = vadd.f32 %v86, %v417
  %v419 = vpop.f32.mrf.mxu0
  %v420 = vpop.f32.mrf.mxu0
  %v421 = vadd.f32 %v86, %v420
  %v422 = vpop.f32.mrf.mxu0
  %423 = vmatprep.mubr.bf16.mxu0 0
  %424 = vmatmul.mubr.bf16.gmra.mxu0 %v271
  %v425 = vpop.f32.mrf.mxu0
  %v426 = vadd.f32 %v86, %v425
  %v427 = vpop.f32.mrf.mxu0
  %v428 = vpop.f32.mrf.mxu0
  %v429 = vadd.f32 %v86, %v428
  %v430 = vpop.f32.mrf.mxu0
  %431 = vmatprep.mubr.bf16.mxu0 0
  %432 = vmatmul.mubr.bf16.gmra.mxu0 %v274
  %v433 = vpop.f32.mrf.mxu0
  %v434 = vadd.f32 %v86, %v433
  %v435 = vpop.f32.mrf.mxu0
  %v436 = vpop.f32.mrf.mxu0
  %v437 = vadd.f32 %v86, %v436
  %v438 = vpop.f32.mrf.mxu0
  %439 = vmatprep.mubr.bf16.mxu0 0
  %440 = vmatmul.mubr.bf16.gmra.mxu0 %v277
  %v441 = vpop.f32.mrf.mxu0
  %v442 = vadd.f32 %v86, %v441
  %v443 = vpop.f32.mrf.mxu0
  %v444 = vpop.f32.mrf.mxu0
  %v445 = vadd.f32 %v86, %v444
  %v446 = vpop.f32.mrf.mxu0
  %447 = vmatprep.mubr.bf16.mxu0 0
  %448 = vmatmul.mubr.bf16.gmra.mxu0 %v280
  %v449 = vpop.f32.mrf.mxu0
  %v450 = vadd.f32 %v86, %v449
  %v451 = vpop.f32.mrf.mxu0
  %v452 = vpop.f32.mrf.mxu0
  %v453 = vadd.f32 %v86, %v452
  %v454 = vpop.f32.mrf.mxu0
  %455 = vmatprep.mubr.bf16.mxu0 0
  %456 = vmatmul.mubr.bf16.gmra.mxu0 %v283
  %v457 = vpop.f32.mrf.mxu0
  %v458 = vadd.f32 %v86, %v457
  %v459 = vpop.f32.mrf.mxu0
  %v460 = vpop.f32.mrf.mxu0
  %v461 = vadd.f32 %v86, %v460
  %v462 = vpop.f32.mrf.mxu0
  %463 = vmatprep.mubr.bf16.mxu0 0
  %464 = vmatmul.mubr.bf16.gmra.mxu0 %v286
  %v465 = vpop.f32.mrf.mxu0
  %v466 = vadd.f32 %v86, %v465
  %v467 = vpop.f32.mrf.mxu0
  %v468 = vpop.f32.mrf.mxu0
  %v469 = vadd.f32 %v86, %v468
  %v470 = vpop.f32.mrf.mxu0
  %471 = vmatprep.mubr.bf16.mxu0 0
  %472 = vmatmul.mubr.bf16.gmra.mxu0 %v289
  %v473 = vpop.f32.mrf.mxu0
  %v474 = vadd.f32 %v86, %v473
  %v475 = vpop.f32.mrf.mxu0
  %v476 = vpop.f32.mrf.mxu0
  %v477 = vadd.f32 %v86, %v476
  %v478 = vpop.f32.mrf.mxu0
  %479 = vmatprep.mubr.bf16.mxu0 0
  %480 = vmatmul.mubr.bf16.gmra.mxu0 %v292
  %v481 = vpop.f32.mrf.mxu0
  %v482 = vadd.f32 %v86, %v481
  %v483 = vpop.f32.mrf.mxu0
  %v484 = vpop.f32.mrf.mxu0
  %v485 = vadd.f32 %v86, %v484
  %v486 = vpop.f32.mrf.mxu0
  %487 = vmatprep.mubr.bf16.mxu0 0
  %488 = vmatmul.mubr.bf16.gmra.mxu0 %v295
  %v489 = vpop.f32.mrf.mxu0
  %v490 = vadd.f32 %v86, %v489
  %v491 = vpop.f32.mrf.mxu0
  %v492 = vpop.f32.mrf.mxu0
  %v493 = vadd.f32 %v86, %v492
  %v494 = vpop.f32.mrf.mxu0
  %495 = vmatprep.mubr.bf16.mxu0 0
  %496 = vmatmul.mubr.bf16.gmra.mxu0 %v298
  %v497 = vpop.f32.mrf.mxu0
  %v498 = vadd.f32 %v86, %v497
  %v499 = vpop.f32.mrf.mxu0
  %v500 = vpop.f32.mrf.mxu0
  %v501 = vadd.f32 %v86, %v500
  %v502 = vpop.f32.mrf.mxu0
  %503 = vmatprep.mubr.bf16.mxu0 0
  %504 = vmatmul.mubr.bf16.gmra.mxu0 %v301
  %v505 = vpop.f32.mrf.mxu0
  %v506 = vadd.f32 %v86, %v505
  %v507 = vpop.f32.mrf.mxu0
  %v508 = vpop.f32.mrf.mxu0
  %v509 = vadd.f32 %v86, %v508
  %v510 = vpop.f32.mrf.mxu0
  %511 = vmatprep.mubr.bf16.mxu0 0
  %512 = vmatmul.mubr.bf16.gmra.mxu0 %v304
  %v513 = vpop.f32.mrf.mxu0
  %v514 = vadd.f32 %v86, %v513
  %v515 = vpop.f32.mrf.mxu0
  %v516 = vpop.f32.mrf.mxu0
  %v517 = vadd.f32 %v86, %v516
  %v518 = vpop.f32.mrf.mxu0
  %519 = vmatprep.mubr.bf16.mxu0 0
  %520 = vmatmul.mubr.bf16.gmra.mxu0 %v307
  %v521 = vpop.f32.mrf.mxu0
  %v522 = vadd.f32 %v86, %v521
  %v523 = vpop.f32.mrf.mxu0
  %v524 = vpop.f32.mrf.mxu0
  %v525 = vadd.f32 %v86, %v524
  %v526 = vpop.f32.mrf.mxu0
  %527 = vmatprep.mubr.bf16.mxu0 0
  %528 = vmatmul.mubr.bf16.gmra.mxu0 %v310
  %v529 = vpop.f32.mrf.mxu0
  %v530 = vadd.f32 %v86, %v529
  %v531 = vpop.f32.mrf.mxu0
  %v532 = vpop.f32.mrf.mxu0
  %v533 = vadd.f32 %v86, %v532
  %v534 = vpop.f32.mrf.mxu0
  %535 = vmatprep.mubr.bf16.mxu0 0
  %536 = vmatmul.mubr.bf16.gmra.mxu0 %v313
  %v537 = vpop.f32.mrf.mxu0
  %v538 = vadd.f32 %v86, %v537
  %v539 = vpop.f32.mrf.mxu0
  %v540 = vpop.f32.mrf.mxu0
  %v541 = vadd.f32 %v86, %v540
  %v542 = vpop.f32.mrf.mxu0
  %543 = vmatprep.mubr.bf16.mxu0 0
  %544 = vmatmul.mubr.bf16.gmra.mxu0 %v316
  %v545 = vpop.f32.mrf.mxu0
  %v546 = vadd.f32 %v86, %v545
  %v547 = vpop.f32.mrf.mxu0
  %v548 = vpop.f32.mrf.mxu0
  %v549 = vadd.f32 %v86, %v548
  %v550 = vpop.f32.mrf.mxu0
  %551 = vmatprep.mubr.bf16.mxu0 0
  %552 = vmatmul.mubr.bf16.gmra.mxu0 %v319
  %v553 = vpop.f32.mrf.mxu0
  %v554 = vadd.f32 %v86, %v553
  %v555 = vpop.f32.mrf.mxu0
  %v556 = vpop.f32.mrf.mxu0
  %v557 = vadd.f32 %v86, %v556
  %v558 = vpop.f32.mrf.mxu0
  %559 = vmatprep.mubr.bf16.mxu0 0
  %560 = vmatmul.mubr.bf16.gmra.mxu0 %v322
  %v561 = vpop.f32.mrf.mxu0
  %v562 = vadd.f32 %v86, %v561
  %v563 = vpop.f32.mrf.mxu0
  %v564 = vpop.f32.mrf.mxu0
  %v565 = vadd.f32 %v86, %v564
  %v566 = vpop.f32.mrf.mxu0
  %567 = vmatprep.mubr.bf16.mxu0 0
  %568 = vmatmul.mubr.bf16.gmra.mxu0 %v325
  %v569 = vpop.f32.mrf.mxu0
  %v570 = vadd.f32 %v86, %v569
  %v571 = vpop.f32.mrf.mxu0
  %v572 = vpop.f32.mrf.mxu0
  %v573 = vadd.f32 %v86, %v572
  %v574 = vpop.f32.mrf.mxu0
  %575 = vmatprep.mubr.bf16.mxu0 0
  %576 = vmatmul.mubr.bf16.gmra.mxu0 %v328
  %v577 = vpop.f32.mrf.mxu0
  %v578 = vadd.f32 %v86, %v577
  %v579 = vpop.f32.mrf.mxu0
  %v580 = vpop.f32.mrf.mxu0
  %v581 = vadd.f32 %v86, %v580
  %v582 = vpop.f32.mrf.mxu0
  %583 = vmatprep.mubr.bf16.mxu0 0
  %584 = vmatmul.mubr.bf16.gmra.mxu0 %v331
  %v585 = vpop.f32.mrf.mxu0
  %v586 = vadd.f32 %v86, %v585
  %v587 = vpop.f32.mrf.mxu0
  %v588 = vpop.f32.mrf.mxu0
  %v589 = vadd.f32 %v86, %v588
  %v590 = vpop.f32.mrf.mxu0
  %591 = vmatprep.mubr.bf16.mxu0 0
  %592 = vmatmul.mubr.bf16.gmra.mxu0 %v334
  %v593 = vpop.f32.mrf.mxu0
  %v594 = vadd.f32 %v86, %v593
  %v595 = vpop.f32.mrf.mxu0
  %v596 = vpop.f32.mrf.mxu0
  %v597 = vadd.f32 %v86, %v596
  %v598 = vpop.f32.mrf.mxu0
  %599 = vmatprep.mubr.bf16.mxu0 0
  %600 = vmatmul.mubr.bf16.gmra.mxu0 %v337
  %v601 = vpop.f32.mrf.mxu0
  %v602 = vadd.f32 %v86, %v601
  %v603 = vpop.f32.mrf.mxu0
  %v604 = vpop.f32.mrf.mxu0
  %v605 = vadd.f32 %v86, %v604
  %v606 = vpop.f32.mrf.mxu0
  %607 = vmatprep.mubr.bf16.mxu0 0
  %608 = vmatmul.mubr.bf16.gmra.mxu0 %v340
  %v609 = vpop.f32.mrf.mxu0
  %v610 = vadd.f32 %v86, %v609
  %v611 = vpop.f32.mrf.mxu0
  %v612 = vpop.f32.mrf.mxu0
  %v613 = vadd.f32 %v86, %v612
  %v614 = vpop.f32.mrf.mxu0
  %615 = vmatprep.mubr.bf16.mxu0 0
  %616 = vmatmul.mubr.bf16.gmra.mxu0 %v343
  %v617 = vpop.f32.mrf.mxu0
  %v618 = vadd.f32 %v86, %v617
  %v619 = vpop.f32.mrf.mxu0
  %v620 = vpop.f32.mrf.mxu0
  %v621 = vadd.f32 %v86, %v620
  %v622 = vpop.f32.mrf.mxu0
  %623 = vmatprep.mubr.bf16.mxu0 0
  %624 = vmatmul.mubr.bf16.gmra.mxu0 %v346
  %v625 = vpop.f32.mrf.mxu0
  %v626 = vadd.f32 %v86, %v625
  %v627 = vpop.f32.mrf.mxu0
  %v628 = vpop.f32.mrf.mxu0
  %v629 = vadd.f32 %v86, %v628
  %v630 = vpop.f32.mrf.mxu0
  %631 = vmatprep.mubr.bf16.mxu0 0
  %632 = vmatmul.mubr.bf16.gmra.mxu0 %v349
  %v633 = vpop.f32.mrf.mxu0
  %v634 = vadd.f32 %v86, %v633
  %v635 = vpop.f32.mrf.mxu0
  %v636 = vpop.f32.mrf.mxu0
  %v637 = vadd.f32 %v86, %v636
  %v638 = vpop.f32.mrf.mxu0
  %639 = vdwg.mxu0
  %v640 = vlaneseq
  %v641 = vand.u32 %v640, 127
  %vm642 = vcmp.lt.s32.totalorder %v641, 16
  %v643 = vmax.f32 %v386, 0.0
  %v644 = vmax.f32 %v389, 0.0
  %v645 = vmax.f32 %v394, 0.0
  %v646 = vmax.f32 %v397, 0.0
  %v647 = vmax.f32 %v402, 0.0
  %v648 = vmax.f32 %v405, 0.0
  %v649 = vmax.f32 %v410, 0.0
  %v650 = vmax.f32 %v413, 0.0
  %v651 = vmax.f32 %v418, 0.0
  %v652 = vmax.f32 %v421, 0.0
  %v653 = vmax.f32 %v426, 0.0
  %v654 = vmax.f32 %v429, 0.0
  %v655 = vmax.f32 %v434, 0.0
  %v656 = vmax.f32 %v437, 0.0
  %v657 = vmax.f32 %v442, 0.0
  %v658 = vmax.f32 %v445, 0.0
  %v659 = vmax.f32 %v450, 0.0
  %v660 = vmax.f32 %v453, 0.0
  %v661 = vmax.f32 %v458, 0.0
  %v662 = vmax.f32 %v461, 0.0
  %v663 = vmax.f32 %v466, 0.0
  %v664 = vmax.f32 %v469, 0.0
  %v665 = vmax.f32 %v474, 0.0
  %v666 = vmax.f32 %v477, 0.0
  %v667 = vmax.f32 %v482, 0.0
  %v668 = vmax.f32 %v485, 0.0
  %v669 = vmax.f32 %v490, 0.0
  %v670 = vmax.f32 %v493, 0.0
  %v671 = vmax.f32 %v498, 0.0
  %v672 = vmax.f32 %v501, 0.0
  %v673 = vmax.f32 %v506, 0.0
  %v674 = vmax.f32 %v509, 0.0
  %v675 = vmax.f32 %v514, 0.0
  %v676 = vmax.f32 %v517, 0.0
  %v677 = vmax.f32 %v522, 0.0
  %v678 = vmax.f32 %v525, 0.0
  %v679 = vmax.f32 %v530, 0.0
  %v680 = vmax.f32 %v533, 0.0
  %v681 = vmax.f32 %v538, 0.0
  %v682 = vmax.f32 %v541, 0.0
  %v683 = vmax.f32 %v546, 0.0
  %v684 = vmax.f32 %v549, 0.0
  %v685 = vmax.f32 %v554, 0.0
  %v686 = vmax.f32 %v557, 0.0
  %v687 = vmax.f32 %v562, 0.0
  %v688 = vmax.f32 %v565, 0.0
  %v689 = vmax.f32 %v570, 0.0
  %v690 = vmax.f32 %v573, 0.0
  %v691 = vmax.f32 %v578, 0.0
  %v692 = vmax.f32 %v581, 0.0
  %v693 = vmax.f32 %v586, 0.0
  %v694 = vmax.f32 %v589, 0.0
  %v695 = vmax.f32 %v594, 0.0
  %v696 = vmax.f32 %v597, 0.0
  %v697 = vmax.f32 %v602, 0.0
  %v698 = vmax.f32 %v605, 0.0
  %v699 = vmax.f32 %v610, 0.0
  %v700 = vmax.f32 %v613, 0.0
  %v701 = vmax.f32 %v618, 0.0
  %v702 = vmax.f32 %v621, 0.0
  %v703 = vmax.f32 %v626, 0.0
  %v704 = vmax.f32 %v629, 0.0
  %v705 = vmax.f32 %v634, 0.0
  %v706 = vmax.f32 %v637, 0.0
  %v707 = vsel %vm642, %v643, %v386
  %v708 = vsel %vm642, %v644, %v389
  %v709 = vsel %vm642, %v645, %v394
  %v710 = vsel %vm642, %v646, %v397
  %v711 = vsel %vm642, %v647, %v402
  %v712 = vsel %vm642, %v648, %v405
  %v713 = vsel %vm642, %v649, %v410
  %v714 = vsel %vm642, %v650, %v413
  %v715 = vsel %vm642, %v651, %v418
  %v716 = vsel %vm642, %v652, %v421
  %v717 = vsel %vm642, %v653, %v426
  %v718 = vsel %vm642, %v654, %v429
  %v719 = vsel %vm642, %v655, %v434
  %v720 = vsel %vm642, %v656, %v437
  %v721 = vsel %vm642, %v657, %v442
  %v722 = vsel %vm642, %v658, %v445
  %v723 = vsel %vm642, %v659, %v450
  %v724 = vsel %vm642, %v660, %v453
  %v725 = vsel %vm642, %v661, %v458
  %v726 = vsel %vm642, %v662, %v461
  %v727 = vsel %vm642, %v663, %v466
  %v728 = vsel %vm642, %v664, %v469
  %v729 = vsel %vm642, %v665, %v474
  %v730 = vsel %vm642, %v666, %v477
  %v731 = vsel %vm642, %v667, %v482
  %v732 = vsel %vm642, %v668, %v485
  %v733 = vsel %vm642, %v669, %v490
  %v734 = vsel %vm642, %v670, %v493
  %v735 = vsel %vm642, %v671, %v498
  %v736 = vsel %vm642, %v672, %v501
  %v737 = vsel %vm642, %v673, %v506
  %v738 = vsel %vm642, %v674, %v509
  %v739 = vsel %vm642, %v675, %v514
  %v740 = vsel %vm642, %v676, %v517
  %v741 = vsel %vm642, %v677, %v522
  %v742 = vsel %vm642, %v678, %v525
  %v743 = vsel %vm642, %v679, %v530
  %v744 = vsel %vm642, %v680, %v533
  %v745 = vsel %vm642, %v681, %v538
  %v746 = vsel %vm642, %v682, %v541
  %v747 = vsel %vm642, %v683, %v546
  %v748 = vsel %vm642, %v684, %v549
  %v749 = vsel %vm642, %v685, %v554
  %v750 = vsel %vm642, %v686, %v557
  %v751 = vsel %vm642, %v687, %v562
  %v752 = vsel %vm642, %v688, %v565
  %v753 = vsel %vm642, %v689, %v570
  %v754 = vsel %vm642, %v690, %v573
  %v755 = vsel %vm642, %v691, %v578
  %v756 = vsel %vm642, %v692, %v581
  %v757 = vsel %vm642, %v693, %v586
  %v758 = vsel %vm642, %v694, %v589
  %v759 = vsel %vm642, %v695, %v594
  %v760 = vsel %vm642, %v696, %v597
  %v761 = vsel %vm642, %v697, %v602
  %v762 = vsel %vm642, %v698, %v605
  %v763 = vsel %vm642, %v699, %v610
  %v764 = vsel %vm642, %v700, %v613
  %v765 = vsel %vm642, %v701, %v618
  %v766 = vsel %vm642, %v702, %v621
  %v767 = vsel %vm642, %v703, %v626
  %v768 = vsel %vm642, %v704, %v629
  %v769 = vsel %vm642, %v705, %v634
  %v770 = vsel %vm642, %v706, %v637
  %vm771 = vcmask 654336
  %772 = vst.msk [vmem:[%s3] sm:$0xff] %vm771, %v707
  %773 = vst.msk [vmem:[%s3 + $0x8] sm:$0xff] %vm771, %v708
  %774 = vst.msk [vmem:[%s3 + $0x10] sm:$0xff] %vm771, %v709
  %775 = vst.msk [vmem:[%s3 + $0x18] sm:$0xff] %vm771, %v710
  %776 = vst.msk [vmem:[%s3 + $0x20] sm:$0xff] %vm771, %v711
  %777 = vst.msk [vmem:[%s3 + $0x28] sm:$0xff] %vm771, %v712
  %778 = vst.msk [vmem:[%s3 + $0x30] sm:$0xff] %vm771, %v713
  %779 = vst.msk [vmem:[%s3 + $0x38] sm:$0xff] %vm771, %v714
  %780 = vst.msk [vmem:[%s3 + $0x40] sm:$0xff] %vm771, %v715
  %781 = vst.msk [vmem:[%s3 + $0x48] sm:$0xff] %vm771, %v716
  %782 = vst.msk [vmem:[%s3 + $0x50] sm:$0xff] %vm771, %v717
  %783 = vst.msk [vmem:[%s3 + $0x58] sm:$0xff] %vm771, %v718
  %784 = vst.msk [vmem:[%s3 + $0x60] sm:$0xff] %vm771, %v719
  %785 = vst.msk [vmem:[%s3 + $0x68] sm:$0xff] %vm771, %v720
  %786 = vst.msk [vmem:[%s3 + $0x70] sm:$0xff] %vm771, %v721
  %787 = vst.msk [vmem:[%s3 + $0x78] sm:$0xff] %vm771, %v722
  %788 = vst.msk [vmem:[%s3 + $0x80] sm:$0xff] %vm771, %v723
  %789 = vst.msk [vmem:[%s3 + $0x88] sm:$0xff] %vm771, %v724
  %790 = vst.msk [vmem:[%s3 + $0x90] sm:$0xff] %vm771, %v725
  %791 = vst.msk [vmem:[%s3 + $0x98] sm:$0xff] %vm771, %v726
  %792 = vst.msk [vmem:[%s3 + $0xa0] sm:$0xff] %vm771, %v727
  %793 = vst.msk [vmem:[%s3 + $0xa8] sm:$0xff] %vm771, %v728
  %794 = vst.msk [vmem:[%s3 + $0xb0] sm:$0xff] %vm771, %v729
  %795 = vst.msk [vmem:[%s3 + $0xb8] sm:$0xff] %vm771, %v730
  %796 = vst.msk [vmem:[%s3 + $0xc0] sm:$0xff] %vm771, %v731
  %797 = vst.msk [vmem:[%s3 + $0xc8] sm:$0xff] %vm771, %v732
  %798 = vst.msk [vmem:[%s3 + $0xd0] sm:$0xff] %vm771, %v733
  %799 = vst.msk [vmem:[%s3 + $0xd8] sm:$0xff] %vm771, %v734
  %800 = vst.msk [vmem:[%s3 + $0xe0] sm:$0xff] %vm771, %v735
  %801 = vst.msk [vmem:[%s3 + $0xe8] sm:$0xff] %vm771, %v736
  %802 = vst.msk [vmem:[%s3 + $0xf0] sm:$0xff] %vm771, %v737
  %803 = vst.msk [vmem:[%s3 + $0xf8] sm:$0xff] %vm771, %v738
  %804 = vst.msk [vmem:[%s3 + $0x100] sm:$0xff] %vm771, %v739
  %805 = vst.msk [vmem:[%s3 + $0x108] sm:$0xff] %vm771, %v740
  %806 = vst.msk [vmem:[%s3 + $0x110] sm:$0xff] %vm771, %v741
  %807 = vst.msk [vmem:[%s3 + $0x118] sm:$0xff] %vm771, %v742
  %808 = vst.msk [vmem:[%s3 + $0x120] sm:$0xff] %vm771, %v743
  %809 = vst.msk [vmem:[%s3 + $0x128] sm:$0xff] %vm771, %v744
  %810 = vst.msk [vmem:[%s3 + $0x130] sm:$0xff] %vm771, %v745
  %811 = vst.msk [vmem:[%s3 + $0x138] sm:$0xff] %vm771, %v746
  %812 = vst.msk [vmem:[%s3 + $0x140] sm:$0xff] %vm771, %v747
  %813 = vst.msk [vmem:[%s3 + $0x148] sm:$0xff] %vm771, %v748
  %814 = vst.msk [vmem:[%s3 + $0x150] sm:$0xff] %vm771, %v749
  %815 = vst.msk [vmem:[%s3 + $0x158] sm:$0xff] %vm771, %v750
  %816 = vst.msk [vmem:[%s3 + $0x160] sm:$0xff] %vm771, %v751
  %817 = vst.msk [vmem:[%s3 + $0x168] sm:$0xff] %vm771, %v752
  %818 = vst.msk [vmem:[%s3 + $0x170] sm:$0xff] %vm771, %v753
  %819 = vst.msk [vmem:[%s3 + $0x178] sm:$0xff] %vm771, %v754
  %820 = vst.msk [vmem:[%s3 + $0x180] sm:$0xff] %vm771, %v755
  %821 = vst.msk [vmem:[%s3 + $0x188] sm:$0xff] %vm771, %v756
  %822 = vst.msk [vmem:[%s3 + $0x190] sm:$0xff] %vm771, %v757
  %823 = vst.msk [vmem:[%s3 + $0x198] sm:$0xff] %vm771, %v758
  %824 = vst.msk [vmem:[%s3 + $0x1a0] sm:$0xff] %vm771, %v759
  %825 = vst.msk [vmem:[%s3 + $0x1a8] sm:$0xff] %vm771, %v760
  %826 = vst.msk [vmem:[%s3 + $0x1b0] sm:$0xff] %vm771, %v761
  %827 = vst.msk [vmem:[%s3 + $0x1b8] sm:$0xff] %vm771, %v762
  %828 = vst.msk [vmem:[%s3 + $0x1c0] sm:$0xff] %vm771, %v763
  %829 = vst.msk [vmem:[%s3 + $0x1c8] sm:$0xff] %vm771, %v764
  %830 = vst.msk [vmem:[%s3 + $0x1d0] sm:$0xff] %vm771, %v765
  %831 = vst.msk [vmem:[%s3 + $0x1d8] sm:$0xff] %vm771, %v766
  %832 = vst.msk [vmem:[%s3 + $0x1e0] sm:$0xff] %vm771, %v767
  %833 = vst.msk [vmem:[%s3 + $0x1e8] sm:$0xff] %vm771, %v768
  %834 = vst.msk [vmem:[%s3 + $0x1f0] sm:$0xff] %vm771, %v769
  %835 = vst.msk [vmem:[%s3 + $0x1f8] sm:$0xff] %vm771, %v770
  // Predicated region
  $region14: #{se_bottleneck_forward.2} parent=0 // pred_check
    _
  $region15: #{se_bottleneck_forward.2} parent=0 // pred_check_branch
    %837 = sbr.rel (0) target = $region17
  $region16: #{se_bottleneck_forward.2} parent=0 // pred_region
    _
  $region17: #{se_bottleneck_forward.2} parent=0 // pred_fallthru
    _
  // Predicated region
  $region18: #{se_bottleneck_forward.2} parent=0 // pred_check
    _
  $region19: #{se_bottleneck_forward.2} parent=0 // pred_check_branch
    %839 = sbr.rel (0) target = $region21
  $region20: #{se_bottleneck_forward.2} parent=0 // pred_region
    _
  $region21: #{se_bottleneck_forward.2} parent=0 // pred_fallthru
    _

// kernel: se_bottleneck_forward.3
$region0: #{se_bottleneck_forward.3}
  #allocation0 [shape = 'u32[]', space=smem, size = 0x4, offset = 0x4, fixed_abs, tag = 'smem constant byte address 0x4 - core index']
  #allocation1 [shape = 'u32[144,128]{1,0:T(1,128)}', space=vmem, size = 0x12000, scoped, tag = 'internal scratch']
  %s0 = inlined_call_operand.vmem [shape: bf16[2,288,48], index: 0, kind: input, shape index: {}]
  %s1 = inlined_call_operand.vmem [shape: f32[2,256,64], index: 1, kind: input, shape index: {}]
  %s2 = inlined_call_operand.vmem [shape: bf16[3,48,16], index: 2, kind: input, shape index: {}]
  %s3 = inlined_call_operand.vmem [shape: f32[1,16], index: 3, kind: input, shape index: {}]
  %s4 = inlined_call_operand.vmem [shape: bf16[16,64], index: 4, kind: input, shape index: {}]
  %s5 = inlined_call_operand.vmem [shape: f32[1,64], index: 5, kind: input, shape index: {}]
  %s6 = inlined_call_operand.vmem [shape: bf16[64,16], index: 6, kind: input, shape index: {}]
  %s7 = inlined_call_operand.vmem [shape: bf16[16,64], index: 7, kind: input, shape index: {}]
  %s8 = inlined_call_operand.hbm [shape: f32[2,256,64], index: 8, kind: output, shape index: {}]
  %s9 = sld [smem:[#allocation0]]
  $region65: #{se_bottleneck_forward.3} parent=0
    _
  %s11 = ssub.s32 1, %s9
  %s12 = scalar_select 0, %s11, %s9
  $region1: #{se_bottleneck_forward.3} parent=0
    #allocation2 [shape = 'u8[262144]{0}', space=vmem, size = 0x40000, scoped, tag = 'output window, operand 0']
    #allocation3 [shape = 's32[2]{0}', space=sflag, size = 0x8, scoped, tag = 'scoped memory for se_bottleneck_forward.3']
    %13 = vsyncpa [#allocation3], 0
    %s14 = scalar_lea.sflag [#allocation3], 1
    %15 = vsyncpa %s14, 0
    loop: start=0, step=1, limit=4
    $region2: #{se_bottleneck_forward.3} parent=1 // loop_pre_header
      _
    $region3: #{se_bottleneck_forward.3} parent=1 // loop_header
      %s17 = sphi 0, %s21
      %p18 = scmp.ge.s32.totalorder %s17, 4
      %s27 = sphi 0, %s29
      %s30 = sphi 0, %s27
      %s31 = sphi 0, %s30
      %s47 = sphi 0, %s31
      %s53 = sphi 0, %s55
      %s56 = sphi 0, %s53
      %s57 = sphi 0, %s56
      %s73 = sphi 0, %s57
      %s77 = sphi 0, %s77
      %s79 = sphi 0, %s77
      %s80 = sphi 0, %s79
      %s94 = sphi 0, %s80
      %s98 = sphi 0, %s98
      %s100 = sphi 0, %s98
      %s101 = sphi 0, %s100
      %s115 = sphi 0, %s101
      %s119 = sphi 0, %s119
      %s121 = sphi 0, %s119
      %s122 = sphi 0, %s121
      %s136 = sphi 0, %s122
      %s140 = sphi 0, %s140
      %s142 = sphi 0, %s140
      %s143 = sphi 0, %s142
      %s157 = sphi 0, %s143
      %s161 = sphi 0, %s161
      %s163 = sphi 0, %s161
      %s164 = sphi 0, %s163
      %s178 = sphi 0, %s164
      %s182 = sphi 0, %s182
      %s184 = sphi 0, %s182
      %s185 = sphi 0, %s184
      %s199 = sphi 0, %s185
      %s205 = sphi 0, %s207
      %s208 = sphi 0, %s205
      %s209 = sphi 0, %s208
      %s225 = sphi 0, %s209
    $region4: #{se_bottleneck_forward.3} parent=1 // loop_header_branch
      %20 = sbr.rel (%p18) target = $region8
    $region5: #{se_bottleneck_forward.3} parent=1 // loop_body
      %s22 = ssub.s32 %s17, 1
      %s23 = ssub.s32 %s17, 2
      %s24 = sadd.s32 %s17, 1
      %s25 = ssub.s32 %s17, %s24
      %p26 = scmp.eq.s32.totalorder %s25, 0
      %s28 = sadd.s32 %s27, 1
      %s29 = scalar_select %p26, %s27, %s28
      %p32 = pneg %p26
      %p33 = scmp.eq.s32.totalorder %s17, 1
      %p34 = por %p32, %p33
      %p35 = scmp.ne.s32.totalorder %s27, %s30
      %p36 = scmp.eq.s32.totalorder %s17, 0
      %p37 = por %p35, %p36
      %p38 = scmp.ne.s32.totalorder %s27, %s30
      %p39 = scmp.eq.s32.totalorder %s22, 1
      %p40 = por %p38, %p39
      %p41 = scmp.ne.s32.totalorder %s30, %s31
      %p42 = scmp.eq.s32.totalorder %s22, 0
      %p43 = por %p41, %p42
      %p44 = scmp.ne.s32.totalorder %s30, %s31
      %p45 = scmp.eq.s32.totalorder %s23, 1
      %p46 = por %p44, %p45
      %p48 = scmp.ne.s32.totalorder %s31, %s47
      %p49 = scmp.eq.s32.totalorder %s23, 0
      %p50 = por %p48, %p49
      %s51 = ssub.s32 %s17, %s24
      %p52 = scmp.eq.s32.totalorder %s51, 0
      %s54 = sadd.s32 %s53, 1
      %s55 = scalar_select %p52, %s53, %s54
      %p58 = pneg %p52
      %p59 = scmp.eq.s32.totalorder %s17, 1
      %p60 = por %p58, %p59
      %p61 = scmp.ne.s32.totalorder %s53, %s56
      %p62 = scmp.eq.s32.totalorder %s17, 0
      %p63 = por %p61, %p62
      %p64 = scmp.ne.s32.totalorder %s53, %s56
      %p65 = scmp.eq.s32.totalorder %s22, 1
      %p66 = por %p64, %p65
      %p67 = scmp.ne.s32.totalorder %s56, %s57
      %p68 = scmp.eq.s32.totalorder %s22, 0
      %p69 = por %p67, %p68
      %p70 = scmp.ne.s32.totalorder %s56, %s57
      %p71 = scmp.eq.s32.totalorder %s23, 1
      %p72 = por %p70, %p71
      %p74 = scmp.ne.s32.totalorder %s57, %s73
      %p75 = scmp.eq.s32.totalorder %s23, 0
      %p76 = por %p74, %p75
      %s78 = sadd.s32 %s77, 1
      %p81 = scmp.eq.s32.totalorder %s17, 1
      %p82 = scmp.ne.s32.totalorder %s77, %s79
      %p83 = scmp.eq.s32.totalorder %s17, 0
      %p84 = por %p82, %p83
      %p85 = scmp.ne.s32.totalorder %s77, %s79
      %p86 = scmp.eq.s32.totalorder %s22, 1
      %p87 = por %p85, %p86
      %p88 = scmp.ne.s32.totalorder %s79, %s80
      %p89 = scmp.eq.s32.totalorder %s22, 0
      %p90 = por %p88, %p89
      %p91 = scmp.ne.s32.totalorder %s79, %s80
      %p92 = scmp.eq.s32.totalorder %s23, 1
      %p93 = por %p91, %p92
      %p95 = scmp.ne.s32.totalorder %s80, %s94
      %p96 = scmp.eq.s32.totalorder %s23, 0
      %p97 = por %p95, %p96
      %s99 = sadd.s32 %s98, 1
      %p102 = scmp.eq.s32.totalorder %s17, 1
      %p103 = scmp.ne.s32.totalorder %s98, %s100
      %p104 = scmp.eq.s32.totalorder %s17, 0
      %p105 = por %p103, %p104
      %p106 = scmp.ne.s32.totalorder %s98, %s100
      %p107 = scmp.eq.s32.totalorder %s22, 1
      %p108 = por %p106, %p107
      %p109 = scmp.ne.s32.totalorder %s100, %s101
      %p110 = scmp.eq.s32.totalorder %s22, 0
      %p111 = por %p109, %p110
      %p112 = scmp.ne.s32.totalorder %s100, %s101
      %p113 = scmp.eq.s32.totalorder %s23, 1
      %p114 = por %p112, %p113
      %p116 = scmp.ne.s32.totalorder %s101, %s115
      %p117 = scmp.eq.s32.totalorder %s23, 0
      %p118 = por %p116, %p117
      %s120 = sadd.s32 %s119, 1
      %p123 = scmp.eq.s32.totalorder %s17, 1
      %p124 = scmp.ne.s32.totalorder %s119, %s121
      %p125 = scmp.eq.s32.totalorder %s17, 0
      %p126 = por %p124, %p125
      %p127 = scmp.ne.s32.totalorder %s119, %s121
      %p128 = scmp.eq.s32.totalorder %s22, 1
      %p129 = por %p127, %p128
      %p130 = scmp.ne.s32.totalorder %s121, %s122
      %p131 = scmp.eq.s32.totalorder %s22, 0
      %p132 = por %p130, %p131
      %p133 = scmp.ne.s32.totalorder %s121, %s122
      %p134 = scmp.eq.s32.totalorder %s23, 1
      %p135 = por %p133, %p134
      %p137 = scmp.ne.s32.totalorder %s122, %s136
      %p138 = scmp.eq.s32.totalorder %s23, 0
      %p139 = por %p137, %p138
      %s141 = sadd.s32 %s140, 1
      %p144 = scmp.eq.s32.totalorder %s17, 1
      %p145 = scmp.ne.s32.totalorder %s140, %s142
      %p146 = scmp.eq.s32.totalorder %s17, 0
      %p147 = por %p145, %p146
      %p148 = scmp.ne.s32.totalorder %s140, %s142
      %p149 = scmp.eq.s32.totalorder %s22, 1
      %p150 = por %p148, %p149
      %p151 = scmp.ne.s32.totalorder %s142, %s143
      %p152 = scmp.eq.s32.totalorder %s22, 0
      %p153 = por %p151, %p152
      %p154 = scmp.ne.s32.totalorder %s142, %s143
      %p155 = scmp.eq.s32.totalorder %s23, 1
      %p156 = por %p154, %p155
      %p158 = scmp.ne.s32.totalorder %s143, %s157
      %p159 = scmp.eq.s32.totalorder %s23, 0
      %p160 = por %p158, %p159
      %s162 = sadd.s32 %s161, 1
      %p165 = scmp.eq.s32.totalorder %s17, 1
      %p166 = scmp.ne.s32.totalorder %s161, %s163
      %p167 = scmp.eq.s32.totalorder %s17, 0
      %p168 = por %p166, %p167
      %p169 = scmp.ne.s32.totalorder %s161, %s163
      %p170 = scmp.eq.s32.totalorder %s22, 1
      %p171 = por %p169, %p170
      %p172 = scmp.ne.s32.totalorder %s163, %s164
      %p173 = scmp.eq.s32.totalorder %s22, 0
      %p174 = por %p172, %p173
      %p175 = scmp.ne.s32.totalorder %s163, %s164
      %p176 = scmp.eq.s32.totalorder %s23, 1
      %p177 = por %p175, %p176
      %p179 = scmp.ne.s32.totalorder %s164, %s178
      %p180 = scmp.eq.s32.totalorder %s23, 0
      %p181 = por %p179, %p180
      %s183 = sadd.s32 %s182, 1
      %p186 = scmp.eq.s32.totalorder %s17, 1
      %p187 = scmp.ne.s32.totalorder %s182, %s184
      %p188 = scmp.eq.s32.totalorder %s17, 0
      %p189 = por %p187, %p188
      %p190 = scmp.ne.s32.totalorder %s182, %s184
      %p191 = scmp.eq.s32.totalorder %s22, 1
      %p192 = por %p190, %p191
      %p193 = scmp.ne.s32.totalorder %s184, %s185
      %p194 = scmp.eq.s32.totalorder %s22, 0
      %p195 = por %p193, %p194
      %p196 = scmp.ne.s32.totalorder %s184, %s185
      %p197 = scmp.eq.s32.totalorder %s23, 1
      %p198 = por %p196, %p197
      %p200 = scmp.ne.s32.totalorder %s185, %s199
      %p201 = scmp.eq.s32.totalorder %s23, 0
      %p202 = por %p200, %p201
      %s203 = ssub.s32 %s17, %s24
      %p204 = scmp.eq.s32.totalorder %s203, 0
      %s206 = sadd.s32 %s205, 1
      %s207 = scalar_select %p204, %s205, %s206
      %p210 = pneg %p204
      %p211 = scmp.eq.s32.totalorder %s17, 1
      %p212 = por %p210, %p211
      %p213 = scmp.ne.s32.totalorder %s205, %s208
      %p214 = scmp.eq.s32.totalorder %s17, 0
      %p215 = por %p213, %p214
      %p216 = scmp.ne.s32.totalorder %s205, %s208
      %p217 = scmp.eq.s32.totalorder %s22, 1
      %p218 = por %p216, %p217
      %p219 = scmp.ne.s32.totalorder %s208, %s209
      %p220 = scmp.eq.s32.totalorder %s22, 0
      %p221 = por %p219, %p220
      %p222 = scmp.ne.s32.totalorder %s208, %s209
      %p223 = scmp.eq.s32.totalorder %s23, 1
      %p224 = por %p222, %p223
      %p226 = scmp.ne.s32.totalorder %s209, %s225
      %p227 = scmp.eq.s32.totalorder %s23, 0
      %p228 = por %p226, %p227
      %p229 = scmp.le.s32.totalorder 1, %s17
      %p230 = scmp.lt.s32.totalorder %s17, 3
      %p231 = pnand %p229, %p230
      %p232 = pneg %p231
      // Predicated region
      $region9: #{se_bottleneck_forward.3} parent=5 // pred_check
        _
      $region10: #{se_bottleneck_forward.3} parent=5 // pred_check_branch
        %234 = sbr.rel (%p231) target = $region12
      $region11: #{se_bottleneck_forward.3} parent=5 // pred_region
        %s235 = ssub.s32 %s17, 1
        // Predicated region
        $region13: #{se_bottleneck_forward.3} parent=11 // pred_check
          %p236 = pneg %p90
        $region14: #{se_bottleneck_forward.3} parent=11 // pred_check_branch
          %238 = sbr.rel (%p236) target = $region16
        $region15: #{se_bottleneck_forward.3} parent=11 // pred_region
          _
        $region16: #{se_bottleneck_forward.3} parent=11 // pred_fallthru
          _
        // Predicated region
        $region17: #{se_bottleneck_forward.3} parent=11 // pred_check
          %p239 = pneg %p111
        $region18: #{se_bottleneck_forward.3} parent=11 // pred_check_branch
          %241 = sbr.rel (%p239) target = $region20
        $region19: #{se_bottleneck_forward.3} parent=11 // pred_region
          _
        $region20: #{se_bottleneck_forward.3} parent=11 // pred_fallthru
          _
        // Predicated region
        $region21: #{se_bottleneck_forward.3} parent=11 // pred_check
          %p242 = pneg %p132
        $region22: #{se_bottleneck_forward.3} parent=11 // pred_check_branch
          %244 = sbr.rel (%p242) target = $region24
        $region23: #{se_bottleneck_forward.3} parent=11 // pred_region
          _
        $region24: #{se_bottleneck_forward.3} parent=11 // pred_fallthru
          _
        // Predicated region
        $region25: #{se_bottleneck_forward.3} parent=11 // pred_check
          %p245 = pneg %p153
        $region26: #{se_bottleneck_forward.3} parent=11 // pred_check_branch
          %247 = sbr.rel (%p245) target = $region28
        $region27: #{se_bottleneck_forward.3} parent=11 // pred_region
          _
        $region28: #{se_bottleneck_forward.3} parent=11 // pred_fallthru
          _
        // Predicated region
        $region29: #{se_bottleneck_forward.3} parent=11 // pred_check
          %p248 = pneg %p174
        $region30: #{se_bottleneck_forward.3} parent=11 // pred_check_branch
          %250 = sbr.rel (%p248) target = $region32
        $region31: #{se_bottleneck_forward.3} parent=11 // pred_region
          _
        $region32: #{se_bottleneck_forward.3} parent=11 // pred_fallthru
          _
        // Predicated region
        $region33: #{se_bottleneck_forward.3} parent=11 // pred_check
          %p251 = pneg %p195
        $region34: #{se_bottleneck_forward.3} parent=11 // pred_check_branch
          %253 = sbr.rel (%p251) target = $region36
        $region35: #{se_bottleneck_forward.3} parent=11 // pred_region
          _
        $region36: #{se_bottleneck_forward.3} parent=11 // pred_fallthru
          _
      $region12: #{se_bottleneck_forward.3} parent=5 // pred_fallthru
        _
      %p254 = scmp.lt.s32.totalorder %s17, 2
      // Predicated region
      $region37: #{se_bottleneck_forward.3} parent=5 // pred_check
        %p255 = pneg %p254
      $region38: #{se_bottleneck_forward.3} parent=5 // pred_check_branch
        %257 = sbr.rel (%p255) target = $region40
      $region39: #{se_bottleneck_forward.3} parent=5 // pred_region
        // Predicated region
        $region41: #{se_bottleneck_forward.3} parent=39 // pred_check
          %p258 = pneg %p37
        $region42: #{se_bottleneck_forward.3} parent=39 // pred_check_branch
          %260 = sbr.rel (%p258) target = $region44
        $region43: #{se_bottleneck_forward.3} parent=39 // pred_region
          %p261 = scmp.lt.s32.totalorder %s17, 1
          %s262 = scalar_select %p261, %s17, 1
          %s263 = smul.addr %s262, 36
          %s264 = smul.addr %s263, 4
          %s265 = scalar_lea.vmem %s0, %s264
        $region44: #{se_bottleneck_forward.3} parent=39 // pred_fallthru
          _
        // Predicated region
        $region45: #{se_bottleneck_forward.3} parent=39 // pred_check
          %p266 = pneg %p63
        $region46: #{se_bottleneck_forward.3} parent=39 // pred_check_branch
          %268 = sbr.rel (%p266) target = $region48
        $region47: #{se_bottleneck_forward.3} parent=39 // pred_region
          %p269 = scmp.lt.s32.totalorder %s17, 1
          %s270 = scalar_select %p269, %s17, 1
          %s271 = smul.addr %s270, 32
          %s272 = smul.addr %s271, 8
          %s273 = scalar_lea.vmem %s1, %s272
        $region48: #{se_bottleneck_forward.3} parent=39 // pred_fallthru
          _
      $region40: #{se_bottleneck_forward.3} parent=5 // pred_fallthru
        _
      %p274 = scmp.le.s32.totalorder 1, %s17
      %p275 = scmp.lt.s32.totalorder %s17, 3
      %p276 = pnand %p274, %p275
      %p277 = pneg %p276
      // Predicated region
      $region49: #{se_bottleneck_forward.3} parent=5 // pred_check
        _
      $region50: #{se_bottleneck_forward.3} parent=5 // pred_check_branch
        %279 = sbr.rel (%p276) target = $region52
      $region51: #{se_bottleneck_forward.3} parent=5 // pred_region
        %s280 = ssub.s32 %s17, 1
        %p281 = scmp.lt.s32.totalorder %s22, 1
        %s282 = scalar_select %p281, %s22, 1
        %s283 = smul.addr %s282, 36
        %s284 = smul.addr %s283, 4
        %s285 = scalar_lea.vmem %s0, %s284
        %p286 = pneg %p43
        %p287 = pneg %p40
        %p288 = scmp.lt.s32.totalorder %s22, 1
        %s289 = scalar_select %p288, %s22, 1
        %s290 = smul.addr %s289, 32
        %s291 = smul.addr %s290, 8
        %s292 = scalar_lea.vmem %s1, %s291
        %p293 = pneg %p69
        %p294 = pneg %p66
        %p295 = pneg %p90
        %p296 = pneg %p87
        %p297 = pneg %p111
        %p298 = pneg %p108
        %p299 = pneg %p132
        %p300 = pneg %p129
        %p301 = pneg %p153
        %p302 = pneg %p150
        %p303 = pneg %p174
        %p304 = pneg %p171
        %p305 = pneg %p195
        %p306 = pneg %p192
        %p307 = pneg %p221
        %p308 = pneg %p218
        %s309 = sand.u32 %s208, 1
        %s310 = scalar_lea.sflag [#allocation3], %s309
        %s311 = sand.u32 %s208, 1
        %s312 = smul.addr %s311, 256
        %s313 = scalar_lea.vmem [#allocation2], %s312
        %p314 = scmp.lt.s32.totalorder %s22, 1
        %s315 = scalar_select %p314, %s22, 1
        %s316 = smul.addr %s315, 36
        %s317 = smul.addr %s316, 4
        %s318 = scalar_lea.vmem %s0, %s317
        %p319 = scmp.lt.s32.totalorder %s22, 1
        %s320 = scalar_select %p319, %s22, 1
        %s321 = smul.addr %s320, 32
        %s322 = smul.addr %s321, 8
        %s323 = scalar_lea.vmem %s1, %s322
        %v325 = vld [vmem:[%s318] sm:$0xf]
        %v326 = vld [vmem:[%s318 + $0x4] sm:$0xf]
        %v327 = vld [vmem:[%s318 + $0x8] sm:$0xf]
        %v328 = vld [vmem:[%s318 + $0xc] sm:$0xf]
        %v329 = vld [vmem:[%s318 + $0x10] sm:$0xf]
        %v330 = vld [vmem:[%s318 + $0x14] sm:$0xf]
        %v331 = vld [vmem:[%s318 + $0x18] sm:$0xf]
        %v332 = vld [vmem:[%s318 + $0x1c] sm:$0xf]
        %v333 = vld [vmem:[%s318 + $0x20] sm:$0xf]
        %v334 = vld [vmem:[%s318 + $0x24] sm:$0xf]
        %v335 = vld [vmem:[%s318 + $0x28] sm:$0xf]
        %v336 = vld [vmem:[%s318 + $0x2c] sm:$0xf]
        %v337 = vld [vmem:[%s318 + $0x30] sm:$0xf]
        %v338 = vld [vmem:[%s318 + $0x34] sm:$0xf]
        %v339 = vld [vmem:[%s318 + $0x38] sm:$0xf]
        %v340 = vld [vmem:[%s318 + $0x3c] sm:$0xf]
        %v341 = vld [vmem:[%s318 + $0x40] sm:$0xf]
        %v342 = vld [vmem:[%s318 + $0x44] sm:$0xf]
        %v343 = vld [vmem:[%s318 + $0x48] sm:$0xf]
        %v344 = vld [vmem:[%s318 + $0x4c] sm:$0xf]
        %v345 = vld [vmem:[%s318 + $0x50] sm:$0xf]
        %v346 = vld [vmem:[%s318 + $0x54] sm:$0xf]
        %v347 = vld [vmem:[%s318 + $0x58] sm:$0xf]
        %v348 = vld [vmem:[%s318 + $0x5c] sm:$0xf]
        %v349 = vld [vmem:[%s318 + $0x60] sm:$0xf]
        %v350 = vld [vmem:[%s318 + $0x64] sm:$0xf]
        %v351 = vld [vmem:[%s318 + $0x68] sm:$0xf]
        %v352 = vld [vmem:[%s318 + $0x6c] sm:$0xf]
        %v353 = vld [vmem:[%s318 + $0x70] sm:$0xf]
        %v354 = vld [vmem:[%s318 + $0x74] sm:$0xf]
        %v355 = vld [vmem:[%s318 + $0x78] sm:$0xf]
        %v356 = vld [vmem:[%s318 + $0x7c] sm:$0xf]
        %v357 = vld [vmem:[%s2] sm:$0xf]
        %v358 = vld [vmem:[%s2 + $0x4] sm:$0xf]
        %v359 = vld [vmem:[%s2 + $0x8] sm:$0xf]
        %v360 = vld [vmem:[%s2 + $0xc] sm:$0xf]
        %v361 = vld [vmem:[%s2 + $0x10] sm:$0xf]
        %v362 = vld [vmem:[%s2 + $0x14] sm:$0xf]
        %v363 = vld [vmem:[%s318 + $0x80] sm:$0xf]
        %v364 = vld [vmem:[%s318 + $0x84] sm:$0xf]
        %s365 = scalar_lea.vmem %s2, 24
        %v366 = vld [vmem:[%s365] sm:$0xf]
        %v367 = vld [vmem:[%s365 + $0x4] sm:$0xf]
        %v368 = vld [vmem:[%s365 + $0x8] sm:$0xf]
        %v369 = vld [vmem:[%s365 + $0xc] sm:$0xf]
        %v370 = vld [vmem:[%s365 + $0x10] sm:$0xf]
        %v371 = vld [vmem:[%s365 + $0x14] sm:$0xf]
        %v404 = vunpack.c.l.b16 %v327
        %v405 = vunpack.c.l.b16 %v328
        %v406 = vunpack.c.l.b16 %v329
        %v407 = vunpack.c.l.b16 %v330
        %v408 = vunpack.c.l.b16 %v331
        %v409 = vunpack.c.l.b16 %v332
        %v410 = vunpack.c.l.b16 %v333
        %v411 = vunpack.c.l.b16 %v334
        %v412 = vunpack.c.l.b16 %v335
        %v413 = vunpack.c.l.b16 %v336
        %v414 = vunpack.c.l.b16 %v337
        %v415 = vunpack.c.l.b16 %v338
        %v416 = vunpack.c.l.b16 %v339
        %v417 = vunpack.c.l.b16 %v340
        %v418 = vunpack.c.l.b16 %v341
        %v419 = vunpack.c.l.b16 %v342
        %v420 = vunpack.c.l.b16 %v343
        %v421 = vunpack.c.l.b16 %v344
        %v422 = vunpack.c.l.b16 %v345
        %v423 = vunpack.c.l.b16 %v346
        %v424 = vunpack.c.l.b16 %v347
        %v425 = vunpack.c.l.b16 %v348
        %v426 = vunpack.c.l.b16 %v349
        %v427 = vunpack.c.l.b16 %v350
        %v428 = vunpack.c.l.b16 %v351
        %v429 = vunpack.c.l.b16 %v352
        %v430 = vunpack.c.l.b16 %v353
        %v431 = vunpack.c.l.b16 %v354
        %v432 = vunpack.c.l.b16 %v355
        %v433 = vunpack.c.l.b16 %v356
        %v434 = vunpack.c.l.b16 %v363
        %v435 = vunpack.c.l.b16 %v364
        %v436 = vpack.c.b16 %v405, %v404
        %v437 = vpack.c.b16 %v407, %v406
        %v438 = vpack.c.b16 %v409, %v408
        %v439 = vpack.c.b16 %v411, %v410
        %v440 = vpack.c.b16 %v413, %v412
        %v441 = vpack.c.b16 %v415, %v414
        %v442 = vpack.c.b16 %v417, %v416
        %v443 = vpack.c.b16 %v419, %v418
        %v444 = vpack.c.b16 %v421, %v420
        %v445 = vpack.c.b16 %v423, %v422
        %v446 = vpack.c.b16 %v425, %v424
        %v447 = vpack.c.b16 %v427, %v426
        %v448 = vpack.c.b16 %v429, %v428
        %v449 = vpack.c.b16 %v431, %v430
        %v450 = vpack.c.b16 %v433, %v432
        %v451 = vpack.c.b16 %v435, %v434
        %v458 = vunpack.c.l.b16 %v366
        %v459 = vunpack.c.l.b16 %v367
        %v460 = vunpack.c.l.b16 %v368
        %v461 = vunpack.c.l.b16 %v369
        %v462 = vunpack.c.l.b16 %v370
        %v463 = vunpack.c.l.b16 %v371
        %v464 = vpack.c.b16 %v459, %v458
        %v465 = vpack.c.b16 %v461, %v460
        %v466 = vpack.c.b16 %v463, %v462
        %vm470 = vcmask 392192
        %v472 = vsel %vm470, %v436, 0
        %v475 = vsel %vm470, %v437, 0
        %v478 = vsel %vm470, %v438, 0
        %v481 = vsel %vm470, %v439, 0
        %v484 = vsel %vm470, %v440, 0
        %v487 = vsel %vm470, %v441, 0
        %v490 = vsel %vm470, %v442, 0
        %v493 = vsel %vm470, %v443, 0
        %v496 = vsel %vm470, %v444, 0
        %v499 = vsel %vm470, %v445, 0
        %v502 = vsel %vm470, %v446, 0
        %v505 = vsel %vm470, %v447, 0
        %v508 = vsel %vm470, %v448, 0
        %v511 = vsel %vm470, %v449, 0
        %v514 = vsel %vm470, %v450, 0
        %v517 = vsel %vm470, %v451, 0
        %519 = vmatprep.subr.bf16.mxu0 0
        %520 = vmatpush1.bf16.msra.mxu0 0
        %521 = vmatprep.subr.bf16.mxu0 0
        %522 = vmatpush1.bf16.msra.mxu0 0
        %523 = vmatprep.subr.bf16.mxu0 0
        %524 = vmatpush1.bf16.msra.mxu0 0
        %525 = vmatprep.subr.bf16.mxu0 0
        %526 = vmatpush1.bf16.msra.mxu0 0
        %527 = vmatprep.subr.bf16.mxu0 0
        %528 = vmatpush1.bf16.msra.mxu0 0
        %529 = vmatprep.subr.bf16.mxu0 0
        %530 = vmatpush1.bf16.msra.mxu0 %v466
        %531 = vmatprep.subr.bf16.mxu0 0
        %532 = vmatpush1.bf16.msra.mxu0 %v465
        %533 = vmatprep.subr.bf16.mxu0 0
        %534 = vmatpush1.bf16.msra.mxu0 %v464
        %535 = vmatprep.subr.bf16.mxu0 0
        %536 = vmatpush2.bf16.msra.mxu0 0
        %537 = vmatprep.subr.bf16.mxu0 0
        %538 = vmatpush2.bf16.msra.mxu0 0
        %539 = vmatprep.subr.bf16.mxu0 0
        %540 = vmatpush2.bf16.msra.mxu0 0
        %541 = vmatprep.subr.bf16.mxu0 0
        %542 = vmatpush2.bf16.msra.mxu0 0
        %543 = vmatprep.subr.bf16.mxu0 0
        %544 = vmatpush2.bf16.msra.mxu0 0
        %545 = vmatprep.subr.bf16.mxu0 0
        %546 = vmatpush2.bf16.msra.mxu0 0
        %547 = vmatprep.subr.bf16.mxu0 0
        %548 = vmatpush2.bf16.msra.mxu0 0
        %549 = vmatprep.subr.bf16.mxu0 0
        %550 = vmatpush2.bf16.msra.mxu0 0
        %551 = vmatprep.mubr.bf16.mxu0 0
        %552 = vmatmul.mubr.bf16.gmra.mxu0 %v472
        %v553 = vpop.f32.mrf.mxu0
        %v554 = vadd.f32 0.0, %v553
        %v555 = vpop.f32.mrf.mxu0
        %v556 = vpop.f32.mrf.mxu0
        %v557 = vadd.f32 0.0, %v556
        %v558 = vpop.f32.mrf.mxu0
        %559 = vmatprep.mubr.bf16.mxu0 0
        %560 = vmatmul.mubr.bf16.gmra.mxu0 %v475
        %v561 = vpop.f32.mrf.mxu0
        %v562 = vadd.f32 0.0, %v561
        %v563 = vpop.f32.mrf.mxu0
        %v564 = vpop.f32.mrf.mxu0
        %v565 = vadd.f32 0.0, %v564
        %v566 = vpop.f32.mrf.mxu0
        %567 = vmatprep.mubr.bf16.mxu0 0
        %568 = vmatmul.mubr.bf16.gmra.mxu0 %v478
        %v569 = vpop.f32.mrf.mxu0
        %v570 = vadd.f32 0.0, %v569
        %v571 = vpop.f32.mrf.mxu0
        %v572 = vpop.f32.mrf.mxu0
        %v573 = vadd.f32 0.0, %v572
        %v574 = vpop.f32.mrf.mxu0
        %575 = vmatprep.mubr.bf16.mxu0 0
        %576 = vmatmul.mubr.bf16.gmra.mxu0 %v481
        %v577 = vpop.f32.mrf.mxu0
        %v578 = vadd.f32 0.0, %v577
        %v579 = vpop.f32.mrf.mxu0
        %v580 = vpop.f32.mrf.mxu0
        %v581 = vadd.f32 0.0, %v580
        %v582 = vpop.f32.mrf.mxu0
        %583 = vmatprep.mubr.bf16.mxu0 0
        %584 = vmatmul.mubr.bf16.gmra.mxu0 %v484
        %v585 = vpop.f32.mrf.mxu0
        %v586 = vadd.f32 0.0, %v585
        %v587 = vpop.f32.mrf.mxu0
        %v588 = vpop.f32.mrf.mxu0
        %v589 = vadd.f32 0.0, %v588
        %v590 = vpop.f32.mrf.mxu0
        %591 = vmatprep.mubr.bf16.mxu0 0
        %592 = vmatmul.mubr.bf16.gmra.mxu0 %v487
        %v593 = vpop.f32.mrf.mxu0
        %v594 = vadd.f32 0.0, %v593
        %v595 = vpop.f32.mrf.mxu0
        %v596 = vpop.f32.mrf.mxu0
        %v597 = vadd.f32 0.0, %v596
        %v598 = vpop.f32.mrf.mxu0
        %599 = vmatprep.mubr.bf16.mxu0 0
        %600 = vmatmul.mubr.bf16.gmra.mxu0 %v490
        %v601 = vpop.f32.mrf.mxu0
        %v602 = vadd.f32 0.0, %v601
        %v603 = vpop.f32.mrf.mxu0
        %v604 = vpop.f32.mrf.mxu0
        %v605 = vadd.f32 0.0, %v604
        %v606 = vpop.f32.mrf.mxu0
        %607 = vmatprep.mubr.bf16.mxu0 0
        %608 = vmatmul.mubr.bf16.gmra.mxu0 %v493
        %v609 = vpop.f32.mrf.mxu0
        %v610 = vadd.f32 0.0, %v609
        %v611 = vpop.f32.mrf.mxu0
        %v612 = vpop.f32.mrf.mxu0
        %v613 = vadd.f32 0.0, %v612
        %v614 = vpop.f32.mrf.mxu0
        %615 = vmatprep.mubr.bf16.mxu0 0
        %616 = vmatmul.mubr.bf16.gmra.mxu0 %v496
        %v617 = vpop.f32.mrf.mxu0
        %v618 = vadd.f32 0.0, %v617
        %v619 = vpop.f32.mrf.mxu0
        %v620 = vpop.f32.mrf.mxu0
        %v621 = vadd.f32 0.0, %v620
        %v622 = vpop.f32.mrf.mxu0
        %623 = vmatprep.mubr.bf16.mxu0 0
        %624 = vmatmul.mubr.bf16.gmra.mxu0 %v499
        %v625 = vpop.f32.mrf.mxu0
        %v626 = vadd.f32 0.0, %v625
        %v627 = vpop.f32.mrf.mxu0
        %v628 = vpop.f32.mrf.mxu0
        %v629 = vadd.f32 0.0, %v628
        %v630 = vpop.f32.mrf.mxu0
        %631 = vmatprep.mubr.bf16.mxu0 0
        %632 = vmatmul.mubr.bf16.gmra.mxu0 %v502
        %v633 = vpop.f32.mrf.mxu0
        %v634 = vadd.f32 0.0, %v633
        %v635 = vpop.f32.mrf.mxu0
        %v636 = vpop.f32.mrf.mxu0
        %v637 = vadd.f32 0.0, %v636
        %v638 = vpop.f32.mrf.mxu0
        %639 = vmatprep.mubr.bf16.mxu0 0
        %640 = vmatmul.mubr.bf16.gmra.mxu0 %v505
        %v641 = vpop.f32.mrf.mxu0
        %v642 = vadd.f32 0.0, %v641
        %v643 = vpop.f32.mrf.mxu0
        %v644 = vpop.f32.mrf.mxu0
        %v645 = vadd.f32 0.0, %v644
        %v646 = vpop.f32.mrf.mxu0
        %647 = vmatprep.mubr.bf16.mxu0 0
        %648 = vmatmul.mubr.bf16.gmra.mxu0 %v508
        %v649 = vpop.f32.mrf.mxu0
        %v650 = vadd.f32 0.0, %v649
        %v651 = vpop.f32.mrf.mxu0
        %v652 = vpop.f32.mrf.mxu0
        %v653 = vadd.f32 0.0, %v652
        %v654 = vpop.f32.mrf.mxu0
        %655 = vmatprep.mubr.bf16.mxu0 0
        %656 = vmatmul.mubr.bf16.gmra.mxu0 %v511
        %v657 = vpop.f32.mrf.mxu0
        %v658 = vadd.f32 0.0, %v657
        %v659 = vpop.f32.mrf.mxu0
        %v660 = vpop.f32.mrf.mxu0
        %v661 = vadd.f32 0.0, %v660
        %v662 = vpop.f32.mrf.mxu0
        %663 = vmatprep.mubr.bf16.mxu0 0
        %664 = vmatmul.mubr.bf16.gmra.mxu0 %v514
        %v665 = vpop.f32.mrf.mxu0
        %v666 = vadd.f32 0.0, %v665
        %v667 = vpop.f32.mrf.mxu0
        %v668 = vpop.f32.mrf.mxu0
        %v669 = vadd.f32 0.0, %v668
        %v670 = vpop.f32.mrf.mxu0
        %671 = vmatprep.mubr.bf16.mxu0 0
        %672 = vmatmul.mubr.bf16.gmra.mxu0 %v517
        %v673 = vpop.f32.mrf.mxu0
        %v674 = vadd.f32 0.0, %v673
        %v675 = vpop.f32.mrf.mxu0
        %v676 = vpop.f32.mrf.mxu0
        %v677 = vadd.f32 0.0, %v676
        %v678 = vpop.f32.mrf.mxu0
        %679 = vdwg.mxu0
        %v682 = vunpack.c.l.b16 %v325
        %v683 = vunpack.c.l.b16 %v326
        %v684 = vpack.c.b16 %v683, %v682
        %v691 = vunpack.c.l.b16 %v357
        %v692 = vunpack.c.l.b16 %v358
        %v693 = vunpack.c.l.b16 %v359
        %v694 = vunpack.c.l.b16 %v360
        %v695 = vunpack.c.l.b16 %v361
        %v696 = vunpack.c.l.b16 %v362
        %v697 = vpack.c.b16 %v692, %v691
        %v698 = vpack.c.b16 %v694, %v693
        %v699 = vpack.c.b16 %v696, %v695
        %v704 = vsel %vm470, %v684, 0
        %706 = vmatprep.subr.bf16.mxu0 0
        %707 = vmatpush1.bf16.msra.mxu0 0
        %708 = vmatprep.subr.bf16.mxu0 0
        %709 = vmatpush1.bf16.msra.mxu0 0
        %710 = vmatprep.subr.bf16.mxu0 0
        %711 = vmatpush1.bf16.msra.mxu0 0
        %712 = vmatprep.subr.bf16.mxu0 0
        %713 = vmatpush1.bf16.msra.mxu0 0
        %714 = vmatprep.subr.bf16.mxu0 0
        %715 = vmatpush1.bf16.msra.mxu0 0
        %716 = vmatprep.subr.bf16.mxu0 0
        %717 = vmatpush1.bf16.msra.mxu0 %v699
        %718 = vmatprep.subr.bf16.mxu0 0
        %719 = vmatpush1.bf16.msra.mxu0 %v698
        %720 = vmatprep.subr.bf16.mxu0 0
        %721 = vmatpush1.bf16.msra.mxu0 %v697
        %722 = vmatprep.subr.bf16.mxu0 0
        %723 = vmatpush2.bf16.msra.mxu0 0
        %724 = vmatprep.subr.bf16.mxu0 0
        %725 = vmatpush2.bf16.msra.mxu0 0
        %726 = vmatprep.subr.bf16.mxu0 0
        %727 = vmatpush2.bf16.msra.mxu0 0
        %728 = vmatprep.subr.bf16.mxu0 0
        %729 = vmatpush2.bf16.msra.mxu0 0
        %730 = vmatprep.subr.bf16.mxu0 0
        %731 = vmatpush2.bf16.msra.mxu0 0
        %732 = vmatprep.subr.bf16.mxu0 0
        %733 = vmatpush2.bf16.msra.mxu0 0
        %734 = vmatprep.subr.bf16.mxu0 0
        %735 = vmatpush2.bf16.msra.mxu0 0
        %736 = vmatprep.subr.bf16.mxu0 0
        %737 = vmatpush2.bf16.msra.mxu0 0
        %738 = vmatprep.mubr.bf16.mxu0 0
        %739 = vmatmul.mubr.bf16.gmra.mxu0 %v704
        %v740 = vpop.f32.mrf.mxu0
        %v741 = vadd.f32 %v554, %v740
        %v742 = vpop.f32.mrf.mxu0
        %v743 = vpop.f32.mrf.mxu0
        %v744 = vadd.f32 %v557, %v743
        %v745 = vpop.f32.mrf.mxu0
        %746 = vmatprep.mubr.bf16.mxu0 0
        %747 = vmatmul.mubr.bf16.gmra.mxu0 %v472
        %v748 = vpop.f32.mrf.mxu0
        %v749 = vadd.f32 %v562, %v748
        %v750 = vpop.f32.mrf.mxu0
        %v751 = vpop.f32.mrf.mxu0
        %v752 = vadd.f32 %v565, %v751
        %v753 = vpop.f32.mrf.mxu0
        %754 = vmatprep.mubr.bf16.mxu0 0
        %755 = vmatmul.mubr.bf16.gmra.mxu0 %v475
        %v756 = vpop.f32.mrf.mxu0
        %v757 = vadd.f32 %v570, %v756
        %v758 = vpop.f32.mrf.mxu0
        %v759 = vpop.f32.mrf.mxu0
        %v760 = vadd.f32 %v573, %v759
        %v761 = vpop.f32.mrf.mxu0
        %762 = vmatprep.mubr.bf16.mxu0 0
        %763 = vmatmul.mubr.bf16.gmra.mxu0 %v478
        %v764 = vpop.f32.mrf.mxu0
        %v765 = vadd.f32 %v578, %v764
        %v766 = vpop.f32.mrf.mxu0
        %v767 = vpop.f32.mrf.mxu0
        %v768 = vadd.f32 %v581, %v767
        %v769 = vpop.f32.mrf.mxu0
        %770 = vmatprep.mubr.bf16.mxu0 0
        %771 = vmatmul.mubr.bf16.gmra.mxu0 %v481
        %v772 = vpop.f32.mrf.mxu0
        %v773 = vadd.f32 %v586, %v772
        %v774 = vpop.f32.mrf.mxu0
        %v775 = vpop.f32.mrf.mxu0
        %v776 = vadd.f32 %v589, %v775
        %v777 = vpop.f32.mrf.mxu0
        %778 = vmatprep.mubr.bf16.mxu0 0
        %779 = vmatmul.mubr.bf16.gmra.mxu0 %v484
        %v780 = vpop.f32.mrf.mxu0
        %v781 = vadd.f32 %v594, %v780
        %v782 = vpop.f32.mrf.mxu0
        %v783 = vpop.f32.mrf.mxu0
        %v784 = vadd.f32 %v597, %v783
        %v785 = vpop.f32.mrf.mxu0
        %786 = vmatprep.mubr.bf16.mxu0 0
        %787 = vmatmul.mubr.bf16.gmra.mxu0 %v487
        %v788 = vpop.f32.mrf.mxu0
        %v789 = vadd.f32 %v602, %v788
        %v790 = vpop.f32.mrf.mxu0
        %v791 = vpop.f32.mrf.mxu0
        %v792 = vadd.f32 %v605, %v791
        %v793 = vpop.f32.mrf.mxu0
        %794 = vmatprep.mubr.bf16.mxu0 0
        %795 = vmatmul.mubr.bf16.gmra.mxu0 %v490
        %v796 = vpop.f32.mrf.mxu0
        %v797 = vadd.f32 %v610, %v796
        %v798 = vpop.f32.mrf.mxu0
        %v799 = vpop.f32.mrf.mxu0
        %v800 = vadd.f32 %v613, %v799
        %v801 = vpop.f32.mrf.mxu0
        %802 = vmatprep.mubr.bf16.mxu0 0
        %803 = vmatmul.mubr.bf16.gmra.mxu0 %v493
        %v804 = vpop.f32.mrf.mxu0
        %v805 = vadd.f32 %v618, %v804
        %v806 = vpop.f32.mrf.mxu0
        %v807 = vpop.f32.mrf.mxu0
        %v808 = vadd.f32 %v621, %v807
        %v809 = vpop.f32.mrf.mxu0
        %810 = vmatprep.mubr.bf16.mxu0 0
        %811 = vmatmul.mubr.bf16.gmra.mxu0 %v496
        %v812 = vpop.f32.mrf.mxu0
        %v813 = vadd.f32 %v626, %v812
        %v814 = vpop.f32.mrf.mxu0
        %v815 = vpop.f32.mrf.mxu0
        %v816 = vadd.f32 %v629, %v815
        %v817 = vpop.f32.mrf.mxu0
        %818 = vmatprep.mubr.bf16.mxu0 0
        %819 = vmatmul.mubr.bf16.gmra.mxu0 %v499
        %v820 = vpop.f32.mrf.mxu0
        %v821 = vadd.f32 %v634, %v820
        %v822 = vpop.f32.mrf.mxu0
        %v823 = vpop.f32.mrf.mxu0
        %v824 = vadd.f32 %v637, %v823
        %v825 = vpop.f32.mrf.mxu0
        %826 = vmatprep.mubr.bf16.mxu0 0
        %827 = vmatmul.mubr.bf16.gmra.mxu0 %v502
        %v828 = vpop.f32.mrf.mxu0
        %v829 = vadd.f32 %v642, %v828
        %v830 = vpop.f32.mrf.mxu0
        %v831 = vpop.f32.mrf.mxu0
        %v832 = vadd.f32 %v645, %v831
        %v833 = vpop.f32.mrf.mxu0
        %834 = vmatprep.mubr.bf16.mxu0 0
        %835 = vmatmul.mubr.bf16.gmra.mxu0 %v505
        %v836 = vpop.f32.mrf.mxu0
        %v837 = vadd.f32 %v650, %v836
        %v838 = vpop.f32.mrf.mxu0
        %v839 = vpop.f32.mrf.mxu0
        %v840 = vadd.f32 %v653, %v839
        %v841 = vpop.f32.mrf.mxu0
        %842 = vmatprep.mubr.bf16.mxu0 0
        %843 = vmatmul.mubr.bf16.gmra.mxu0 %v508
        %v844 = vpop.f32.mrf.mxu0
        %v845 = vadd.f32 %v658, %v844
        %v846 = vpop.f32.mrf.mxu0
        %v847 = vpop.f32.mrf.mxu0
        %v848 = vadd.f32 %v661, %v847
        %v849 = vpop.f32.mrf.mxu0
        %850 = vmatprep.mubr.bf16.mxu0 0
        %851 = vmatmul.mubr.bf16.gmra.mxu0 %v511
        %v852 = vpop.f32.mrf.mxu0
        %v853 = vadd.f32 %v666, %v852
        %v854 = vpop.f32.mrf.mxu0
        %v855 = vpop.f32.mrf.mxu0
        %v856 = vadd.f32 %v669, %v855
        %v857 = vpop.f32.mrf.mxu0
        %858 = vmatprep.mubr.bf16.mxu0 0
        %859 = vmatmul.mubr.bf16.gmra.mxu0 %v514
        %v860 = vpop.f32.mrf.mxu0
        %v861 = vadd.f32 %v674, %v860
        %v862 = vpop.f32.mrf.mxu0
        %v863 = vpop.f32.mrf.mxu0
        %v864 = vadd.f32 %v677, %v863
        %v865 = vpop.f32.mrf.mxu0
        %866 = vdwg.mxu0
        %v867 = vld [vmem:[%s318 + $0x10] sm:$0xf]
        %v868 = vld [vmem:[%s318 + $0x14] sm:$0xf]
        %v869 = vld [vmem:[%s318 + $0x18] sm:$0xf]
        %v870 = vld [vmem:[%s318 + $0x1c] sm:$0xf]
        %v871 = vld [vmem:[%s318 + $0x20] sm:$0xf]
        %v872 = vld [vmem:[%s318 + $0x24] sm:$0xf]
        %v873 = vld [vmem:[%s318 + $0x28] sm:$0xf]
        %v874 = vld [vmem:[%s318 + $0x2c] sm:$0xf]
        %v875 = vld [vmem:[%s318 + $0x30] sm:$0xf]
        %v876 = vld [vmem:[%s318 + $0x34] sm:$0xf]
        %v877 = vld [vmem:[%s318 + $0x38] sm:$0xf]
        %v878 = vld [vmem:[%s318 + $0x3c] sm:$0xf]
        %v879 = vld [vmem:[%s318 + $0x40] sm:$0xf]
        %v880 = vld [vmem:[%s318 + $0x44] sm:$0xf]
        %v881 = vld [vmem:[%s318 + $0x48] sm:$0xf]
        %v882 = vld [vmem:[%s318 + $0x4c] sm:$0xf]
        %v883 = vld [vmem:[%s318 + $0x50] sm:$0xf]
        %v884 = vld [vmem:[%s318 + $0x54] sm:$0xf]
        %v885 = vld [vmem:[%s318 + $0x58] sm:$0xf]
        %v886 = vld [vmem:[%s318 + $0x5c] sm:$0xf]
        %v887 = vld [vmem:[%s318 + $0x60] sm:$0xf]
        %v888 = vld [vmem:[%s318 + $0x64] sm:$0xf]
        %v889 = vld [vmem:[%s318 + $0x68] sm:$0xf]
        %v890 = vld [vmem:[%s318 + $0x6c] sm:$0xf]
        %v891 = vld [vmem:[%s318 + $0x70] sm:$0xf]
        %v892 = vld [vmem:[%s318 + $0x74] sm:$0xf]
        %v893 = vld [vmem:[%s318 + $0x78] sm:$0xf]
        %v894 = vld [vmem:[%s318 + $0x7c] sm:$0xf]
        %v895 = vld [vmem:[%s318 + $0x80] sm:$0xf]
        %v896 = vld [vmem:[%s318 + $0x84] sm:$0xf]
        %v897 = vld [vmem:[%s318 + $0x88] sm:$0xf]
        %v898 = vld [vmem:[%s318 + $0x8c] sm:$0xf]
        %s899 = scalar_lea.vmem %s2, 48
        %v900 = vld [vmem:[%s899] sm:$0xf]
        %v901 = vld [vmem:[%s899 + $0x4] sm:$0xf]
        %v902 = vld [vmem:[%s899 + $0x8] sm:$0xf]
        %v903 = vld [vmem:[%s899 + $0xc] sm:$0xf]
        %v904 = vld [vmem:[%s899 + $0x10] sm:$0xf]
        %v905 = vld [vmem:[%s899 + $0x14] sm:$0xf]
        %v938 = vunpack.c.l.b16 %v867
        %v939 = vunpack.c.l.b16 %v868
        %v940 = vunpack.c.l.b16 %v869
        %v941 = vunpack.c.l.b16 %v870
        %v942 = vunpack.c.l.b16 %v871
        %v943 = vunpack.c.l.b16 %v872
        %v944 = vunpack.c.l.b16 %v873
        %v945 = vunpack.c.l.b16 %v874
        %v946 = vunpack.c.l.b16 %v875
        %v947 = vunpack.c.l.b16 %v876
        %v948 = vunpack.c.l.b16 %v877
        %v949 = vunpack.c.l.b16 %v878
        %v950 = vunpack.c.l.b16 %v879
        %v951 = vunpack.c.l.b16 %v880
        %v952 = vunpack.c.l.b16 %v881
        %v953 = vunpack.c.l.b16 %v882
        %v954 = vunpack.c.l.b16 %v883
        %v955 = vunpack.c.l.b16 %v884
        %v956 = vunpack.c.l.b16 %v885
        %v957 = vunpack.c.l.b16 %v886
        %v958 = vunpack.c.l.b16 %v887
        %v959 = vunpack.c.l.b16 %v888
        %v960 = vunpack.c.l.b16 %v889
        %v961 = vunpack.c.l.b16 %v890
        %v962 = vunpack.c.l.b16 %v891
        %v963 = vunpack.c.l.b16 %v892
        %v964 = vunpack.c.l.b16 %v893
        %v965 = vunpack.c.l.b16 %v894
        %v966 = vunpack.c.l.b16 %v895
        %v967 = vunpack.c.l.b16 %v896
        %v968 = vunpack.c.l.b16 %v897
        %v969 = vunpack.c.l.b16 %v898
        %v970 = vpack.c.b16 %v939, %v938
        %v971 = vpack.c.b16 %v941, %v940
        %v972 = vpack.c.b16 %v943, %v942
        %v973 = vpack.c.b16 %v945, %v944
        %v974 = vpack.c.b16 %v947, %v946
        %v975 = vpack.c.b16 %v949, %v948
        %v976 = vpack.c.b16 %v951, %v950
        %v977 = vpack.c.b16 %v953, %v952
        %v978 = vpack.c.b16 %v955, %v954
        %v979 = vpack.c.b16 %v957, %v956
        %v980 = vpack.c.b16 %v959, %v958
        %v981 = vpack.c.b16 %v961, %v960
        %v982 = vpack.c.b16 %v963, %v962
        %v983 = vpack.c.b16 %v965, %v964
        %v984 = vpack.c.b16 %v967, %v966
        %v985 = vpack.c.b16 %v969, %v968
        %v992 = vunpack.c.l.b16 %v900
        %v993 = vunpack.c.l.b16 %v901
        %v994 = vunpack.c.l.b16 %v902
        %v995 = vunpack.c.l.b16 %v903
        %v996 = vunpack.c.l.b16 %v904
        %v997 = vunpack.c.l.b16 %v905
        %v998 = vpack.c.b16 %v993, %v992
        %v999 = vpack.c.b16 %v995, %v994
        %v1000 = vpack.c.b16 %v997, %v996
        %v1005 = vsel %vm470, %v970, 0
        %v1008 = vsel %vm470, %v971, 0
        %v1011 = vsel %vm470, %v972, 0
        %v1014 = vsel %vm470, %v973, 0
        %v1017 = vsel %vm470, %v974, 0
        %v1020 = vsel %vm470, %v975, 0
        %v1023 = vsel %vm470, %v976, 0
        %v1026 = vsel %vm470, %v977, 0
        %v1029 = vsel %vm470, %v978, 0
        %v1032 = vsel %vm470, %v979, 0
        %v1035 = vsel %vm470, %v980, 0
        %v1038 = vsel %vm470, %v981, 0
        %v1041 = vsel %vm470, %v982, 0
        %v1044 = vsel %vm470, %v983, 0
        %v1047 = vsel %vm470, %v984, 0
        %v1050 = vsel %vm470, %v985, 0
        %1052 = vmatprep.subr.bf16.mxu0 0
        %1053 = vmatpush1.bf16.msra.mxu0 0
        %1054 = vmatprep.subr.bf16.mxu0 0
        %1055 = vmatpush1.bf16.msra.mxu0 0
        %1056 = vmatprep.subr.bf16.mxu0 0
        %1057 = vmatpush1.bf16.msra.mxu0 0
        %1058 = vmatprep.subr.bf16.mxu0 0
        %1059 = vmatpush1.bf16.msra.mxu0 0
        %1060 = vmatprep.subr.bf16.mxu0 0
        %1061 = vmatpush1.bf16.msra.mxu0 0
        %1062 = vmatprep.subr.bf16.mxu0 0
        %1063 = vmatpush1.bf16.msra.mxu0 %v1000
        %1064 = vmatprep.subr.bf16.mxu0 0
        %1065 = vmatpush1.bf16.msra.mxu0 %v999
        %1066 = vmatprep.subr.bf16.mxu0 0
        %1067 = vmatpush1.bf16.msra.mxu0 %v998
        %1068 = vmatprep.subr.bf16.mxu0 0
        %1069 = vmatpush2.bf16.msra.mxu0 0
        %1070 = vmatprep.subr.bf16.mxu0 0
        %1071 = vmatpush2.bf16.msra.mxu0 0
        %1072 = vmatprep.subr.bf16.mxu0 0
        %1073 = vmatpush2.bf16.msra.mxu0 0
        %1074 = vmatprep.subr.bf16.mxu0 0
        %1075 = vmatpush2.bf16.msra.mxu0 0
        %1076 = vmatprep.subr.bf16.mxu0 0
        %1077 = vmatpush2.bf16.msra.mxu0 0
        %1078 = vmatprep.subr.bf16.mxu0 0
        %1079 = vmatpush2.bf16.msra.mxu0 0
        %1080 = vmatprep.subr.bf16.mxu0 0
        %1081 = vmatpush2.bf16.msra.mxu0 0
        %1082 = vmatprep.subr.bf16.mxu0 0
        %1083 = vmatpush2.bf16.msra.mxu0 0
        %1084 = vmatprep.mubr.bf16.mxu0 0
        %1085 = vmatmul.mubr.bf16.gmra.mxu0 %v1005
        %v1086 = vpop.f32.mrf.mxu0
        %v1087 = vadd.f32 0.0, %v1086
        %v1088 = vpop.f32.mrf.mxu0
        %v1089 = vpop.f32.mrf.mxu0
        %v1090 = vadd.f32 0.0, %v1089
        %v1091 = vpop.f32.mrf.mxu0
        %1092 = vmatprep.mubr.bf16.mxu0 0
        %1093 = vmatmul.mubr.bf16.gmra.mxu0 %v1008
        %v1094 = vpop.f32.mrf.mxu0
        %v1095 = vadd.f32 0.0, %v1094
        %v1096 = vpop.f32.mrf.mxu0
        %v1097 = vpop.f32.mrf.mxu0
        %v1098 = vadd.f32 0.0, %v1097
        %v1099 = vpop.f32.mrf.mxu0
        %1100 = vmatprep.mubr.bf16.mxu0 0
        %1101 = vmatmul.mubr.bf16.gmra.mxu0 %v1011
        %v1102 = vpop.f32.mrf.mxu0
        %v1103 = vadd.f32 0.0, %v1102
        %v1104 = vpop.f32.mrf.mxu0
        %v1105 = vpop.f32.mrf.mxu0
        %v1106 = vadd.f32 0.0, %v1105
        %v1107 = vpop.f32.mrf.mxu0
        %1108 = vmatprep.mubr.bf16.mxu0 0
        %1109 = vmatmul.mubr.bf16.gmra.mxu0 %v1014
        %v1110 = vpop.f32.mrf.mxu0
        %v1111 = vadd.f32 0.0, %v1110
        %v1112 = vpop.f32.mrf.mxu0
        %v1113 = vpop.f32.mrf.mxu0
        %v1114 = vadd.f32 0.0, %v1113
        %v1115 = vpop.f32.mrf.mxu0
        %1116 = vmatprep.mubr.bf16.mxu0 0
        %1117 = vmatmul.mubr.bf16.gmra.mxu0 %v1017
        %v1118 = vpop.f32.mrf.mxu0
        %v1119 = vadd.f32 0.0, %v1118
        %v1120 = vpop.f32.mrf.mxu0
        %v1121 = vpop.f32.mrf.mxu0
        %v1122 = vadd.f32 0.0, %v1121
        %v1123 = vpop.f32.mrf.mxu0
        %1124 = vmatprep.mubr.bf16.mxu0 0
        %1125 = vmatmul.mubr.bf16.gmra.mxu0 %v1020
        %v1126 = vpop.f32.mrf.mxu0
        %v1127 = vadd.f32 0.0, %v1126
        %v1128 = vpop.f32.mrf.mxu0
        %v1129 = vpop.f32.mrf.mxu0
        %v1130 = vadd.f32 0.0, %v1129
        %v1131 = vpop.f32.mrf.mxu0
        %1132 = vmatprep.mubr.bf16.mxu0 0
        %1133 = vmatmul.mubr.bf16.gmra.mxu0 %v1023
        %v1134 = vpop.f32.mrf.mxu0
        %v1135 = vadd.f32 0.0, %v1134
        %v1136 = vpop.f32.mrf.mxu0
        %v1137 = vpop.f32.mrf.mxu0
        %v1138 = vadd.f32 0.0, %v1137
        %v1139 = vpop.f32.mrf.mxu0
        %1140 = vmatprep.mubr.bf16.mxu0 0
        %1141 = vmatmul.mubr.bf16.gmra.mxu0 %v1026
        %v1142 = vpop.f32.mrf.mxu0
        %v1143 = vadd.f32 0.0, %v1142
        %v1144 = vpop.f32.mrf.mxu0
        %v1145 = vpop.f32.mrf.mxu0
        %v1146 = vadd.f32 0.0, %v1145
        %v1147 = vpop.f32.mrf.mxu0
        %1148 = vmatprep.mubr.bf16.mxu0 0
        %1149 = vmatmul.mubr.bf16.gmra.mxu0 %v1029
        %v1150 = vpop.f32.mrf.mxu0
        %v1151 = vadd.f32 0.0, %v1150
        %v1152 = vpop.f32.mrf.mxu0
        %v1153 = vpop.f32.mrf.mxu0
        %v1154 = vadd.f32 0.0, %v1153
        %v1155 = vpop.f32.mrf.mxu0
        %1156 = vmatprep.mubr.bf16.mxu0 0
        %1157 = vmatmul.mubr.bf16.gmra.mxu0 %v1032
        %v1158 = vpop.f32.mrf.mxu0
        %v1159 = vadd.f32 0.0, %v1158
        %v1160 = vpop.f32.mrf.mxu0
        %v1161 = vpop.f32.mrf.mxu0
        %v1162 = vadd.f32 0.0, %v1161
        %v1163 = vpop.f32.mrf.mxu0
        %1164 = vmatprep.mubr.bf16.mxu0 0
        %1165 = vmatmul.mubr.bf16.gmra.mxu0 %v1035
        %v1166 = vpop.f32.mrf.mxu0
        %v1167 = vadd.f32 0.0, %v1166
        %v1168 = vpop.f32.mrf.mxu0
        %v1169 = vpop.f32.mrf.mxu0
        %v1170 = vadd.f32 0.0, %v1169
        %v1171 = vpop.f32.mrf.mxu0
        %1172 = vmatprep.mubr.bf16.mxu0 0
        %1173 = vmatmul.mubr.bf16.gmra.mxu0 %v1038
        %v1174 = vpop.f32.mrf.mxu0
        %v1175 = vadd.f32 0.0, %v1174
        %v1176 = vpop.f32.mrf.mxu0
        %v1177 = vpop.f32.mrf.mxu0
        %v1178 = vadd.f32 0.0, %v1177
        %v1179 = vpop.f32.mrf.mxu0
        %1180 = vmatprep.mubr.bf16.mxu0 0
        %1181 = vmatmul.mubr.bf16.gmra.mxu0 %v1041
        %v1182 = vpop.f32.mrf.mxu0
        %v1183 = vadd.f32 0.0, %v1182
        %v1184 = vpop.f32.mrf.mxu0
        %v1185 = vpop.f32.mrf.mxu0
        %v1186 = vadd.f32 0.0, %v1185
        %v1187 = vpop.f32.mrf.mxu0
        %1188 = vmatprep.mubr.bf16.mxu0 0
        %1189 = vmatmul.mubr.bf16.gmra.mxu0 %v1044
        %v1190 = vpop.f32.mrf.mxu0
        %v1191 = vadd.f32 0.0, %v1190
        %v1192 = vpop.f32.mrf.mxu0
        %v1193 = vpop.f32.mrf.mxu0
        %v1194 = vadd.f32 0.0, %v1193
        %v1195 = vpop.f32.mrf.mxu0
        %1196 = vmatprep.mubr.bf16.mxu0 0
        %1197 = vmatmul.mubr.bf16.gmra.mxu0 %v1047
        %v1198 = vpop.f32.mrf.mxu0
        %v1199 = vadd.f32 0.0, %v1198
        %v1200 = vpop.f32.mrf.mxu0
        %v1201 = vpop.f32.mrf.mxu0
        %v1202 = vadd.f32 0.0, %v1201
        %v1203 = vpop.f32.mrf.mxu0
        %1204 = vmatprep.mubr.bf16.mxu0 0
        %1205 = vmatmul.mubr.bf16.gmra.mxu0 %v1050
        %v1206 = vpop.f32.mrf.mxu0
        %v1207 = vadd.f32 0.0, %v1206
        %v1208 = vpop.f32.mrf.mxu0
        %v1209 = vpop.f32.mrf.mxu0
        %v1210 = vadd.f32 0.0, %v1209
        %v1211 = vpop.f32.mrf.mxu0
        %1212 = vdwg.mxu0
        %v1213 = vadd.f32 %v741, %v1087
        %v1214 = vadd.f32 %v744, %v1090
        %v1215 = vadd.f32 %v749, %v1095
        %v1216 = vadd.f32 %v752, %v1098
        %v1217 = vadd.f32 %v757, %v1103
        %v1218 = vadd.f32 %v760, %v1106
        %v1219 = vadd.f32 %v765, %v1111
        %v1220 = vadd.f32 %v768, %v1114
        %v1221 = vadd.f32 %v773, %v1119
        %v1222 = vadd.f32 %v776, %v1122
        %v1223 = vadd.f32 %v781, %v1127
        %v1224 = vadd.f32 %v784, %v1130
        %v1225 = vadd.f32 %v789, %v1135
        %v1226 = vadd.f32 %v792, %v1138
        %v1227 = vadd.f32 %v797, %v1143
        %v1228 = vadd.f32 %v800, %v1146
        %v1229 = vadd.f32 %v805, %v1151
        %v1230 = vadd.f32 %v808, %v1154
        %v1231 = vadd.f32 %v813, %v1159
        %v1232 = vadd.f32 %v816, %v1162
        %v1233 = vadd.f32 %v821, %v1167
        %v1234 = vadd.f32 %v824, %v1170
        %v1235 = vadd.f32 %v829, %v1175
        %v1236 = vadd.f32 %v832, %v1178
        %v1237 = vadd.f32 %v837, %v1183
        %v1238 = vadd.f32 %v840, %v1186
        %v1239 = vadd.f32 %v845, %v1191
        %v1240 = vadd.f32 %v848, %v1194
        %v1241 = vadd.f32 %v853, %v1199
        %v1242 = vadd.f32 %v856, %v1202
        %v1243 = vadd.f32 %v861, %v1207
        %v1244 = vadd.f32 %v864, %v1210
        %v1245 = vld [vmem:[%s3] sm:$0x1]
        %v1247 = vlaneseq
        %v1248 = vshrl.u32 %v1247, 7
        %v1249 = vsub.s32 0, %v1248
        %v1250 = vrot.slane %v1245, %v1249
        %v1252 = vadd.f32 %v1213, %v1250
        %v1253 = vadd.f32 %v1214, %v1250
        %v1254 = vadd.f32 %v1215, %v1250
        %v1255 = vadd.f32 %v1216, %v1250
        %v1256 = vadd.f32 %v1217, %v1250
        %v1257 = vadd.f32 %v1218, %v1250
        %v1258 = vadd.f32 %v1219, %v1250
        %v1259 = vadd.f32 %v1220, %v1250
        %v1260 = vadd.f32 %v1221, %v1250
        %v1261 = vadd.f32 %v1222, %v1250
        %v1262 = vadd.f32 %v1223, %v1250
        %v1263 = vadd.f32 %v1224, %v1250
        %v1264 = vadd.f32 %v1225, %v1250
        %v1265 = vadd.f32 %v1226, %v1250
        %v1266 = vadd.f32 %v1227, %v1250
        %v1267 = vadd.f32 %v1228, %v1250
        %v1268 = vadd.f32 %v1229, %v1250
        %v1269 = vadd.f32 %v1230, %v1250
        %v1270 = vadd.f32 %v1231, %v1250
        %v1271 = vadd.f32 %v1232, %v1250
        %v1272 = vadd.f32 %v1233, %v1250
        %v1273 = vadd.f32 %v1234, %v1250
        %v1274 = vadd.f32 %v1235, %v1250
        %v1275 = vadd.f32 %v1236, %v1250
        %v1276 = vadd.f32 %v1237, %v1250
        %v1277 = vadd.f32 %v1238, %v1250
        %v1278 = vadd.f32 %v1239, %v1250
        %v1279 = vadd.f32 %v1240, %v1250
        %v1280 = vadd.f32 %v1241, %v1250
        %v1281 = vadd.f32 %v1242, %v1250
        %v1282 = vadd.f32 %v1243, %v1250
        %v1283 = vadd.f32 %v1244, %v1250
        %v1284 = vmax.f32 %v1252, 0.0
        %v1285 = vmax.f32 %v1253, 0.0
        %v1286 = vmax.f32 %v1254, 0.0
        %v1287 = vmax.f32 %v1255, 0.0
        %v1288 = vmax.f32 %v1256, 0.0
        %v1289 = vmax.f32 %v1257, 0.0
        %v1290 = vmax.f32 %v1258, 0.0
        %v1291 = vmax.f32 %v1259, 0.0
        %v1292 = vmax.f32 %v1260, 0.0
        %v1293 = vmax.f32 %v1261, 0.0
        %v1294 = vmax.f32 %v1262, 0.0
        %v1295 = vmax.f32 %v1263, 0.0
        %v1296 = vmax.f32 %v1264, 0.0
        %v1297 = vmax.f32 %v1265, 0.0
        %v1298 = vmax.f32 %v1266, 0.0
        %v1299 = vmax.f32 %v1267, 0.0
        %v1300 = vmax.f32 %v1268, 0.0
        %v1301 = vmax.f32 %v1269, 0.0
        %v1302 = vmax.f32 %v1270, 0.0
        %v1303 = vmax.f32 %v1271, 0.0
        %v1304 = vmax.f32 %v1272, 0.0
        %v1305 = vmax.f32 %v1273, 0.0
        %v1306 = vmax.f32 %v1274, 0.0
        %v1307 = vmax.f32 %v1275, 0.0
        %v1308 = vmax.f32 %v1276, 0.0
        %v1309 = vmax.f32 %v1277, 0.0
        %v1310 = vmax.f32 %v1278, 0.0
        %v1311 = vmax.f32 %v1279, 0.0
        %v1312 = vmax.f32 %v1280, 0.0
        %v1313 = vmax.f32 %v1281, 0.0
        %v1314 = vmax.f32 %v1282, 0.0
        %v1315 = vmax.f32 %v1283, 0.0
        %v1316 = vpack.c.bf16 %v1285, %v1284
        %v1317 = vpack.c.bf16 %v1287, %v1286
        %v1318 = vpack.c.bf16 %v1289, %v1288
        %v1319 = vpack.c.bf16 %v1291, %v1290
        %v1320 = vpack.c.bf16 %v1293, %v1292
        %v1321 = vpack.c.bf16 %v1295, %v1294
        %v1322 = vpack.c.bf16 %v1297, %v1296
        %v1323 = vpack.c.bf16 %v1299, %v1298
        %v1324 = vpack.c.bf16 %v1301, %v1300
        %v1325 = vpack.c.bf16 %v1303, %v1302
        %v1326 = vpack.c.bf16 %v1305, %v1304
        %v1327 = vpack.c.bf16 %v1307, %v1306
        %v1328 = vpack.c.bf16 %v1309, %v1308
        %v1329 = vpack.c.bf16 %v1311, %v1310
        %v1330 = vpack.c.bf16 %v1313, %v1312
        %v1331 = vpack.c.bf16 %v1315, %v1314
        %v1332 = vld [vmem:[%s4] sm:$0xf]
        %v1333 = vld [vmem:[%s4 + $0x4] sm:$0xf]
        %v1334 = vld [vmem:[%s5] sm:$0x1]
        %v1336 = vlaneseq
        %v1337 = vshrl.u32 %v1336, 7
        %v1338 = vsub.s32 0, %v1337
        %v1339 = vrot.slane %v1334, %v1338
        %v1343 = vunpack.c.l.b16 %v1332
        %v1344 = vunpack.c.l.b16 %v1333
        %v1345 = vpack.c.b16 %v1344, %v1343
        %vm1347 = vcmask 130048
        %v1349 = vsel %vm1347, %v1316, 0
        %v1352 = vsel %vm1347, %v1317, 0
        %v1355 = vsel %vm1347, %v1318, 0
        %v1358 = vsel %vm1347, %v1319, 0
        %v1361 = vsel %vm1347, %v1320, 0
        %v1364 = vsel %vm1347, %v1321, 0
        %v1367 = vsel %vm1347, %v1322, 0
        %v1370 = vsel %vm1347, %v1323, 0
        %v1373 = vsel %vm1347, %v1324, 0
        %v1376 = vsel %vm1347, %v1325, 0
        %v1379 = vsel %vm1347, %v1326, 0
        %v1382 = vsel %vm1347, %v1327, 0
        %v1385 = vsel %vm1347, %v1328, 0
        %v1388 = vsel %vm1347, %v1329, 0
        %v1391 = vsel %vm1347, %v1330, 0
        %v1394 = vsel %vm1347, %v1331, 0
        %1396 = vmatprep.subr.bf16.mxu0 0
        %1397 = vmatpush1.bf16.msra.mxu0 0
        %1398 = vmatprep.subr.bf16.mxu0 0
        %1399 = vmatpush1.bf16.msra.mxu0 0
        %1400 = vmatprep.subr.bf16.mxu0 0
        %1401 = vmatpush1.bf16.msra.mxu0 0
        %1402 = vmatprep.subr.bf16.mxu0 0
        %1403 = vmatpush1.bf16.msra.mxu0 0
        %1404 = vmatprep.subr.bf16.mxu0 0
        %1405 = vmatpush1.bf16.msra.mxu0 0
        %1406 = vmatprep.subr.bf16.mxu0 0
        %1407 = vmatpush1.bf16.msra.mxu0 0
        %1408 = vmatprep.subr.bf16.mxu0 0
        %1409 = vmatpush1.bf16.msra.mxu0 0
        %1410 = vmatprep.subr.bf16.mxu0 0
        %1411 = vmatpush1.bf16.msra.mxu0 %v1345
        %1412 = vmatprep.subr.bf16.mxu0 0
        %1413 = vmatpush2.bf16.msra.mxu0 0
        %1414 = vmatprep.subr.bf16.mxu0 0
        %1415 = vmatpush2.bf16.msra.mxu0 0
        %1416 = vmatprep.subr.bf16.mxu0 0
        %1417 = vmatpush2.bf16.msra.mxu0 0
        %1418 = vmatprep.subr.bf16.mxu0 0
        %1419 = vmatpush2.bf16.msra.mxu0 0
        %1420 = vmatprep.subr.bf16.mxu0 0
        %1421 = vmatpush2.bf16.msra.mxu0 0
        %1422 = vmatprep.subr.bf16.mxu0 0
        %1423 = vmatpush2.bf16.msra.mxu0 0
        %1424 = vmatprep.subr.bf16.mxu0 0
        %1425 = vmatpush2.bf16.msra.mxu0 0
        %1426 = vmatprep.subr.bf16.mxu0 0
        %1427 = vmatpush2.bf16.msra.mxu0 0
        %1428 = vmatprep.mubr.bf16.mxu0 0
        %1429 = vmatmul.mubr.bf16.gmra.mxu0 %v1349
        %v1430 = vpop.f32.mrf.mxu0
        %v1431 = vadd.f32 %v1339, %v1430
        %v1432 = vpop.f32.mrf.mxu0
        %v1433 = vpop.f32.mrf.mxu0
        %v1434 = vadd.f32 %v1339, %v1433
        %v1435 = vpop.f32.mrf.mxu0
        %1436 = vmatprep.mubr.bf16.mxu0 0
        %1437 = vmatmul.mubr.bf16.gmra.mxu0 %v1352
        %v1438 = vpop.f32.mrf.mxu0
        %v1439 = vadd.f32 %v1339, %v1438
        %v1440 = vpop.f32.mrf.mxu0
        %v1441 = vpop.f32.mrf.mxu0
        %v1442 = vadd.f32 %v1339, %v1441
        %v1443 = vpop.f32.mrf.mxu0
        %1444 = vmatprep.mubr.bf16.mxu0 0
        %1445 = vmatmul.mubr.bf16.gmra.mxu0 %v1355
        %v1446 = vpop.f32.mrf.mxu0
        %v1447 = vadd.f32 %v1339, %v1446
        %v1448 = vpop.f32.mrf.mxu0
        %v1449 = vpop.f32.mrf.mxu0
        %v1450 = vadd.f32 %v1339, %v1449
        %v1451 = vpop.f32.mrf.mxu0
        %1452 = vmatprep.mubr.bf16.mxu0 0
        %1453 = vmatmul.mubr.bf16.gmra.mxu0 %v1358
        %v1454 = vpop.f32.mrf.mxu0
        %v1455 = vadd.f32 %v1339, %v1454
        %v1456 = vpop.f32.mrf.mxu0
        %v1457 = vpop.f32.mrf.mxu0
        %v1458 = vadd.f32 %v1339, %v1457
        %v1459 = vpop.f32.mrf.mxu0
        %1460 = vmatprep.mubr.bf16.mxu0 0
        %1461 = vmatmul.mubr.bf16.gmra.mxu0 %v1361
        %v1462 = vpop.f32.mrf.mxu0
        %v1463 = vadd.f32 %v1339, %v1462
        %v1464 = vpop.f32.mrf.mxu0
        %v1465 = vpop.f32.mrf.mxu0
        %v1466 = vadd.f32 %v1339, %v1465
        %v1467 = vpop.f32.mrf.mxu0
        %1468 = vmatprep.mubr.bf16.mxu0 0
        %1469 = vmatmul.mubr.bf16.gmra.mxu0 %v1364
        %v1470 = vpop.f32.mrf.mxu0
        %v1471 = vadd.f32 %v1339, %v1470
        %v1472 = vpop.f32.mrf.mxu0
        %v1473 = vpop.f32.mrf.mxu0
        %v1474 = vadd.f32 %v1339, %v1473
        %v1475 = vpop.f32.mrf.mxu0
        %1476 = vmatprep.mubr.bf16.mxu0 0
        %1477 = vmatmul.mubr.bf16.gmra.mxu0 %v1367
        %v1478 = vpop.f32.mrf.mxu0
        %v1479 = vadd.f32 %v1339, %v1478
        %v1480 = vpop.f32.mrf.mxu0
        %v1481 = vpop.f32.mrf.mxu0
        %v1482 = vadd.f32 %v1339, %v1481
        %v1483 = vpop.f32.mrf.mxu0
        %1484 = vmatprep.mubr.bf16.mxu0 0
        %1485 = vmatmul.mubr.bf16.gmra.mxu0 %v1370
        %v1486 = vpop.f32.mrf.mxu0
        %v1487 = vadd.f32 %v1339, %v1486
        %v1488 = vpop.f32.mrf.mxu0
        %v1489 = vpop.f32.mrf.mxu0
        %v1490 = vadd.f32 %v1339, %v1489
        %v1491 = vpop.f32.mrf.mxu0
        %1492 = vmatprep.mubr.bf16.mxu0 0
        %1493 = vmatmul.mubr.bf16.gmra.mxu0 %v1373
        %v1494 = vpop.f32.mrf.mxu0
        %v1495 = vadd.f32 %v1339, %v1494
        %v1496 = vpop.f32.mrf.mxu0
        %v1497 = vpop.f32.mrf.mxu0
        %v1498 = vadd.f32 %v1339, %v1497
        %v1499 = vpop.f32.mrf.mxu0
        %1500 = vmatprep.mubr.bf16.mxu0 0
        %1501 = vmatmul.mubr.bf16.gmra.mxu0 %v1376
        %v1502 = vpop.f32.mrf.mxu0
        %v1503 = vadd.f32 %v1339, %v1502
        %v1504 = vpop.f32.mrf.mxu0
        %v1505 = vpop.f32.mrf.mxu0
        %v1506 = vadd.f32 %v1339, %v1505
        %v1507 = vpop.f32.mrf.mxu0
        %1508 = vmatprep.mubr.bf16.mxu0 0
        %1509 = vmatmul.mubr.bf16.gmra.mxu0 %v1379
        %v1510 = vpop.f32.mrf.mxu0
        %v1511 = vadd.f32 %v1339, %v1510
        %v1512 = vpop.f32.mrf.mxu0
        %v1513 = vpop.f32.mrf.mxu0
        %v1514 = vadd.f32 %v1339, %v1513
        %v1515 = vpop.f32.mrf.mxu0
        %1516 = vmatprep.mubr.bf16.mxu0 0
        %1517 = vmatmul.mubr.bf16.gmra.mxu0 %v1382
        %v1518 = vpop.f32.mrf.mxu0
        %v1519 = vadd.f32 %v1339, %v1518
        %v1520 = vpop.f32.mrf.mxu0
        %v1521 = vpop.f32.mrf.mxu0
        %v1522 = vadd.f32 %v1339, %v1521
        %v1523 = vpop.f32.mrf.mxu0
        %1524 = vmatprep.mubr.bf16.mxu0 0
        %1525 = vmatmul.mubr.bf16.gmra.mxu0 %v1385
        %v1526 = vpop.f32.mrf.mxu0
        %v1527 = vadd.f32 %v1339, %v1526
        %v1528 = vpop.f32.mrf.mxu0
        %v1529 = vpop.f32.mrf.mxu0
        %v1530 = vadd.f32 %v1339, %v1529
        %v1531 = vpop.f32.mrf.mxu0
        %1532 = vmatprep.mubr.bf16.mxu0 0
        %1533 = vmatmul.mubr.bf16.gmra.mxu0 %v1388
        %v1534 = vpop.f32.mrf.mxu0
        %v1535 = vadd.f32 %v1339, %v1534
        %v1536 = vpop.f32.mrf.mxu0
        %v1537 = vpop.f32.mrf.mxu0
        %v1538 = vadd.f32 %v1339, %v1537
        %v1539 = vpop.f32.mrf.mxu0
        %1540 = vmatprep.mubr.bf16.mxu0 0
        %1541 = vmatmul.mubr.bf16.gmra.mxu0 %v1391
        %v1542 = vpop.f32.mrf.mxu0
        %v1543 = vadd.f32 %v1339, %v1542
        %v1544 = vpop.f32.mrf.mxu0
        %v1545 = vpop.f32.mrf.mxu0
        %v1546 = vadd.f32 %v1339, %v1545
        %v1547 = vpop.f32.mrf.mxu0
        %1548 = vmatprep.mubr.bf16.mxu0 0
        %1549 = vmatmul.mubr.bf16.gmra.mxu0 %v1394
        %v1550 = vpop.f32.mrf.mxu0
        %v1551 = vadd.f32 %v1339, %v1550
        %v1552 = vpop.f32.mrf.mxu0
        %v1553 = vpop.f32.mrf.mxu0
        %v1554 = vadd.f32 %v1339, %v1553
        %v1555 = vpop.f32.mrf.mxu0
        %1556 = vdwg.mxu0
        %vm1557 = vcmask 523264
        %v1558 = vsel %vm1557, %v1431, 0.0
        %v1559 = vsel %vm1557, %v1434, 0.0
        %v1560 = vadd.f32 %v1558, %v1559
        %v1561 = vsel %vm1557, %v1439, 0.0
        %v1562 = vadd.f32 %v1560, %v1561
        %v1563 = vsel %vm1557, %v1442, 0.0
        %v1564 = vadd.f32 %v1562, %v1563
        %v1565 = vsel %vm1557, %v1447, 0.0
        %v1566 = vadd.f32 %v1564, %v1565
        %v1567 = vsel %vm1557, %v1450, 0.0
        %v1568 = vadd.f32 %v1566, %v1567
        %v1569 = vsel %vm1557, %v1455, 0.0
        %v1570 = vadd.f32 %v1568, %v1569
        %v1571 = vsel %vm1557, %v1458, 0.0
        %v1572 = vadd.f32 %v1570, %v1571
        %v1573 = vsel %vm1557, %v1463, 0.0
        %v1574 = vadd.f32 %v1572, %v1573
        %v1575 = vsel %vm1557, %v1466, 0.0
        %v1576 = vadd.f32 %v1574, %v1575
        %v1577 = vsel %vm1557, %v1471, 0.0
        %v1578 = vadd.f32 %v1576, %v1577
        %v1579 = vsel %vm1557, %v1474, 0.0
        %v1580 = vadd.f32 %v1578, %v1579
        %v1581 = vsel %vm1557, %v1479, 0.0
        %v1582 = vadd.f32 %v1580, %v1581
        %v1583 = vsel %vm1557, %v1482, 0.0
        %v1584 = vadd.f32 %v1582, %v1583
        %v1585 = vsel %vm1557, %v1487, 0.0
        %v1586 = vadd.f32 %v1584, %v1585
        %v1587 = vsel %vm1557, %v1490, 0.0
        %v1588 = vadd.f32 %v1586, %v1587
        %v1589 = vsel %vm1557, %v1495, 0.0
        %v1590 = vadd.f32 %v1588, %v1589
        %v1591 = vsel %vm1557, %v1498, 0.0
        %v1592 = vadd.f32 %v1590, %v1591
        %v1593 = vsel %vm1557, %v1503, 0.0
        %v1594 = vadd.f32 %v1592, %v1593
        %v1595 = vsel %vm1557, %v1506, 0.0
        %v1596 = vadd.f32 %v1594, %v1595
        %v1597 = vsel %vm1557, %v1511, 0.0
        %v1598 = vadd.f32 %v1596, %v1597
        %v1599 = vsel %vm1557, %v1514, 0.0
        %v1600 = vadd.f32 %v1598, %v1599
        %v1601 = vsel %vm1557, %v1519, 0.0
        %v1602 = vadd.f32 %v1600, %v1601
        %v1603 = vsel %vm1557, %v1522, 0.0
        %v1604 = vadd.f32 %v1602, %v1603
        %v1605 = vsel %vm1557, %v1527, 0.0
        %v1606 = vadd.f32 %v1604, %v1605
        %v1607 = vsel %vm1557, %v1530, 0.0
        %v1608 = vadd.f32 %v1606, %v1607
        %v1609 = vsel %vm1557, %v1535, 0.0
        %v1610 = vadd.f32 %v1608, %v1609
        %v1611 = vsel %vm1557, %v1538, 0.0
        %v1612 = vadd.f32 %v1610, %v1611
        %v1613 = vsel %vm1557, %v1543, 0.0
        %v1614 = vadd.f32 %v1612, %v1613
        %v1615 = vsel %vm1557, %v1546, 0.0
        %v1616 = vadd.f32 %v1614, %v1615
        %v1617 = vsel %vm1557, %v1551, 0.0
        %v1618 = vadd.f32 %v1616, %v1617
        %v1619 = vsel %vm1557, %v1554, 0.0
        %v1620 = vadd.f32 %v1618, %v1619
        %v1621 = vrot.slane %v1620, 4
        %v1622 = vadd.f32 %v1620, %v1621
        %v1623 = vrot.slane %v1622, 2
        %v1624 = vadd.f32 %v1622, %v1623
        %v1625 = vrot.slane %v1624, 1
        %v1626 = vadd.f32 %v1624, %v1625
        %v1627 = vrcp.pop 256.0
        %v1628 = vmul.f32 %v1626, %v1627
        %v1629 = vpack.c.bf16 %v1628, %v1628
        %v1630 = vld [vmem:[%s6] sm:$0xf]
        %v1631 = vld [vmem:[%s6 + $0x4] sm:$0xf]
        %v1632 = vld [vmem:[%s6 + $0x8] sm:$0xf]
        %v1633 = vld [vmem:[%s6 + $0xc] sm:$0xf]
        %v1634 = vld [vmem:[%s6 + $0x10] sm:$0xf]
        %v1635 = vld [vmem:[%s6 + $0x14] sm:$0xf]
        %v1636 = vld [vmem:[%s6 + $0x18] sm:$0xf]
        %v1637 = vld [vmem:[%s6 + $0x1c] sm:$0xf]
        %v1646 = vunpack.c.l.b16 %v1630
        %v1647 = vunpack.c.l.b16 %v1631
        %v1648 = vunpack.c.l.b16 %v1632
        %v1649 = vunpack.c.l.b16 %v1633
        %v1650 = vunpack.c.l.b16 %v1634
        %v1651 = vunpack.c.l.b16 %v1635
        %v1652 = vunpack.c.l.b16 %v1636
        %v1653 = vunpack.c.l.b16 %v1637
        %v1654 = vpack.c.b16 %v1647, %v1646
        %v1655 = vpack.c.b16 %v1649, %v1648
        %v1656 = vpack.c.b16 %v1651, %v1650
        %v1657 = vpack.c.b16 %v1653, %v1652
        %v1663 = vsel %vm1557, %v1629, 0
        %1665 = vmatprep.subr.bf16.mxu0 0
        %1666 = vmatpush1.bf16.msra.mxu0 0
        %1667 = vmatprep.subr.bf16.mxu0 0
        %1668 = vmatpush1.bf16.msra.mxu0 0
        %1669 = vmatprep.subr.bf16.mxu0 0
        %1670 = vmatpush1.bf16.msra.mxu0 0
        %1671 = vmatprep.subr.bf16.mxu0 0
        %1672 = vmatpush1.bf16.msra.mxu0 0
        %1673 = vmatprep.subr.bf16.mxu0 0
        %1674 = vmatpush1.bf16.msra.mxu0 %v1657
        %1675 = vmatprep.subr.bf16.mxu0 0
        %1676 = vmatpush1.bf16.msra.mxu0 %v1656
        %1677 = vmatprep.subr.bf16.mxu0 0
        %1678 = vmatpush1.bf16.msra.mxu0 %v1655
        %1679 = vmatprep.subr.bf16.mxu0 0
        %1680 = vmatpush1.bf16.msra.mxu0 %v1654
        %1681 = vmatprep.subr.bf16.mxu0 0
        %1682 = vmatpush2.bf16.msra.mxu0 0
        %1683 = vmatprep.subr.bf16.mxu0 0
        %1684 = vmatpush2.bf16.msra.mxu0 0
        %1685 = vmatprep.subr.bf16.mxu0 0
        %1686 = vmatpush2.bf16.msra.mxu0 0
        %1687 = vmatprep.subr.bf16.mxu0 0
        %1688 = vmatpush2.bf16.msra.mxu0 0
        %1689 = vmatprep.subr.bf16.mxu0 0
        %1690 = vmatpush2.bf16.msra.mxu0 0
        %1691 = vmatprep.subr.bf16.mxu0 0
        %1692 = vmatpush2.bf16.msra.mxu0 0
        %1693 = vmatprep.subr.bf16.mxu0 0
        %1694 = vmatpush2.bf16.msra.mxu0 0
        %1695 = vmatprep.subr.bf16.mxu0 0
        %1696 = vmatpush2.bf16.msra.mxu0 0
        %1697 = vmatprep.mubr.bf16.mxu0 0
        %1698 = vmatmul.mubr.bf16.gmra.mxu0 %v1663
        %v1699 = vpop.f32.mrf.mxu0
        %v1700 = vadd.f32 0.0, %v1699
        %v1701 = vpop.f32.mrf.mxu0
        %v1702 = vpop.f32.mrf.mxu0
        %v1703 = vpop.f32.mrf.mxu0
        %1704 = vdwg.mxu0
        %v1705 = vmax.f32 %v1700, 0.0
        %v1706 = vpack.c.bf16 %v1705, %v1705
        %v1707 = vld [vmem:[%s7] sm:$0xf]
        %v1708 = vld [vmem:[%s7 + $0x4] sm:$0xf]
        %v1711 = vunpack.c.l.b16 %v1707
        %v1712 = vunpack.c.l.b16 %v1708
        %v1713 = vpack.c.b16 %v1712, %v1711
        %v1716 = vsel %vm1347, %v1706, 0
        %1718 = vmatprep.subr.bf16.mxu0 0
        %1719 = vmatpush1.bf16.msra.mxu0 0
        %1720 = vmatprep.subr.bf16.mxu0 0
        %1721 = vmatpush1.bf16.msra.mxu0 0
        %1722 = vmatprep.subr.bf16.mxu0 0
        %1723 = vmatpush1.bf16.msra.mxu0 0
        %1724 = vmatprep.subr.bf16.mxu0 0
        %1725 = vmatpush1.bf16.msra.mxu0 0
        %1726 = vmatprep.subr.bf16.mxu0 0
        %1727 = vmatpush1.bf16.msra.mxu0 0
        %1728 = vmatprep.subr.bf16.mxu0 0
        %1729 = vmatpush1.bf16.msra.mxu0 0
        %1730 = vmatprep.subr.bf16.mxu0 0
        %1731 = vmatpush1.bf16.msra.mxu0 0
        %1732 = vmatprep.subr.bf16.mxu0 0
        %1733 = vmatpush1.bf16.msra.mxu0 %v1713
        %1734 = vmatprep.subr.bf16.mxu0 0
        %1735 = vmatpush2.bf16.msra.mxu0 0
        %1736 = vmatprep.subr.bf16.mxu0 0
        %1737 = vmatpush2.bf16.msra.mxu0 0
        %1738 = vmatprep.subr.bf16.mxu0 0
        %1739 = vmatpush2.bf16.msra.mxu0 0
        %1740 = vmatprep.subr.bf16.mxu0 0
        %1741 = vmatpush2.bf16.msra.mxu0 0
        %1742 = vmatprep.subr.bf16.mxu0 0
        %1743 = vmatpush2.bf16.msra.mxu0 0
        %1744 = vmatprep.subr.bf16.mxu0 0
        %1745 = vmatpush2.bf16.msra.mxu0 0
        %1746 = vmatprep.subr.bf16.mxu0 0
        %1747 = vmatpush2.bf16.msra.mxu0 0
        %1748 = vmatprep.subr.bf16.mxu0 0
        %1749 = vmatpush2.bf16.msra.mxu0 0
        %1750 = vmatprep.mubr.bf16.mxu0 0
        %1751 = vmatmul.mubr.bf16.gmra.mxu0 %v1716
        %v1752 = vpop.f32.mrf.mxu0
        %v1753 = vadd.f32 0.0, %v1752
        %v1754 = vpop.f32.mrf.mxu0
        %v1755 = vpop.f32.mrf.mxu0
        %v1756 = vpop.f32.mrf.mxu0
        %1757 = vdwg.mxu0
        %v1758 = vxor.u32 %v1753, 2147483648
        %v1759 = vmul.f32 %v1758, 1.442695
        %v1760 = vpow.pop %v1759
        %v1761 = vadd.f32 %v1760, 1.0
        %v1762 = vrcp.pop %v1761
        %v1763 = vmul.f32 1.0, %v1762
        %v1764 = vlaneseq
        %v1765 = vshrl.u32 %v1764, 7
        %v1766 = vsub.s32 0, %v1765
        %v1767 = vrot.slane %v1763, %v1766
        %v1768 = vmul.f32 %v1431, %v1767
        %v1769 = vmul.f32 %v1434, %v1767
        %v1770 = vmul.f32 %v1439, %v1767
        %v1771 = vmul.f32 %v1442, %v1767
        %v1772 = vmul.f32 %v1447, %v1767
        %v1773 = vmul.f32 %v1450, %v1767
        %v1774 = vmul.f32 %v1455, %v1767
        %v1775 = vmul.f32 %v1458, %v1767
        %v1776 = vmul.f32 %v1463, %v1767
        %v1777 = vmul.f32 %v1466, %v1767
        %v1778 = vmul.f32 %v1471, %v1767
        %v1779 = vmul.f32 %v1474, %v1767
        %v1780 = vmul.f32 %v1479, %v1767
        %v1781 = vmul.f32 %v1482, %v1767
        %v1782 = vmul.f32 %v1487, %v1767
        %v1783 = vmul.f32 %v1490, %v1767
        %v1784 = vmul.f32 %v1495, %v1767
        %v1785 = vmul.f32 %v1498, %v1767
        %v1786 = vmul.f32 %v1503, %v1767
        %v1787 = vmul.f32 %v1506, %v1767
        %v1788 = vmul.f32 %v1511, %v1767
        %v1789 = vmul.f32 %v1514, %v1767
        %v1790 = vmul.f32 %v1519, %v1767
        %v1791 = vmul.f32 %v1522, %v1767
        %v1792 = vmul.f32 %v1527, %v1767
        %v1793 = vmul.f32 %v1530, %v1767
        %v1794 = vmul.f32 %v1535, %v1767
        %v1795 = vmul.f32 %v1538, %v1767
        %v1796 = vmul.f32 %v1543, %v1767
        %v1797 = vmul.f32 %v1546, %v1767
        %v1798 = vmul.f32 %v1551, %v1767
        %v1799 = vmul.f32 %v1554, %v1767
        %v1800 = vld [vmem:[%s323] sm:$0xff]
        %v1801 = vld [vmem:[%s323 + $0x8] sm:$0xff]
        %v1802 = vld [vmem:[%s323 + $0x10] sm:$0xff]
        %v1803 = vld [vmem:[%s323 + $0x18] sm:$0xff]
        %v1804 = vld [vmem:[%s323 + $0x20] sm:$0xff]
        %v1805 = vld [vmem:[%s323 + $0x28] sm:$0xff]
        %v1806 = vld [vmem:[%s323 + $0x30] sm:$0xff]
        %v1807 = vld [vmem:[%s323 + $0x38] sm:$0xff]
        %v1808 = vld [vmem:[%s323 + $0x40] sm:$0xff]
        %v1809 = vld [vmem:[%s323 + $0x48] sm:$0xff]
        %v1810 = vld [vmem:[%s323 + $0x50] sm:$0xff]
        %v1811 = vld [vmem:[%s323 + $0x58] sm:$0xff]
        %v1812 = vld [vmem:[%s323 + $0x60] sm:$0xff]
        %v1813 = vld [vmem:[%s323 + $0x68] sm:$0xff]
        %v1814 = vld [vmem:[%s323 + $0x70] sm:$0xff]
        %v1815 = vld [vmem:[%s323 + $0x78] sm:$0xff]
        %v1816 = vld [vmem:[%s323 + $0x80] sm:$0xff]
        %v1817 = vld [vmem:[%s323 + $0x88] sm:$0xff]
        %v1818 = vld [vmem:[%s323 + $0x90] sm:$0xff]
        %v1819 = vld [vmem:[%s323 + $0x98] sm:$0xff]
        %v1820 = vld [vmem:[%s323 + $0xa0] sm:$0xff]
        %v1821 = vld [vmem:[%s323 + $0xa8] sm:$0xff]
        %v1822 = vld [vmem:[%s323 + $0xb0] sm:$0xff]
        %v1823 = vld [vmem:[%s323 + $0xb8] sm:$0xff]
        %v1824 = vld [vmem:[%s323 + $0xc0] sm:$0xff]
        %v1825 = vld [vmem:[%s323 + $0xc8] sm:$0xff]
        %v1826 = vld [vmem:[%s323 + $0xd0] sm:$0xff]
        %v1827 = vld [vmem:[%s323 + $0xd8] sm:$0xff]
        %v1828 = vld [vmem:[%s323 + $0xe0] sm:$0xff]
        %v1829 = vld [vmem:[%s323 + $0xe8] sm:$0xff]
        %v1830 = vld [vmem:[%s323 + $0xf0] sm:$0xff]
        %v1831 = vld [vmem:[%s323 + $0xf8] sm:$0xff]
        %v1832 = vadd.f32 %v1768, %v1800
        %v1833 = vadd.f32 %v1769, %v1801
        %v1834 = vadd.f32 %v1770, %v1802
        %v1835 = vadd.f32 %v1771, %v1803
        %v1836 = vadd.f32 %v1772, %v1804
        %v1837 = vadd.f32 %v1773, %v1805
        %v1838 = vadd.f32 %v1774, %v1806
        %v1839 = vadd.f32 %v1775, %v1807
        %v1840 = vadd.f32 %v1776, %v1808
        %v1841 = vadd.f32 %v1777, %v1809
        %v1842 = vadd.f32 %v1778, %v1810
        %v1843 = vadd.f32 %v1779, %v1811
        %v1844 = vadd.f32 %v1780, %v1812
        %v1845 = vadd.f32 %v1781, %v1813
        %v1846 = vadd.f32 %v1782, %v1814
        %v1847 = vadd.f32 %v1783, %v1815
        %v1848 = vadd.f32 %v1784, %v1816
        %v1849 = vadd.f32 %v1785, %v1817
        %v1850 = vadd.f32 %v1786, %v1818
        %v1851 = vadd.f32 %v1787, %v1819
        %v1852 = vadd.f32 %v1788, %v1820
        %v1853 = vadd.f32 %v1789, %v1821
        %v1854 = vadd.f32 %v1790, %v1822
        %v1855 = vadd.f32 %v1791, %v1823
        %v1856 = vadd.f32 %v1792, %v1824
        %v1857 = vadd.f32 %v1793, %v1825
        %v1858 = vadd.f32 %v1794, %v1826
        %v1859 = vadd.f32 %v1795, %v1827
        %v1860 = vadd.f32 %v1796, %v1828
        %v1861 = vadd.f32 %v1797, %v1829
        %v1862 = vadd.f32 %v1798, %v1830
        %v1863 = vadd.f32 %v1799, %v1831
        %v1864 = vmax.f32 %v1832, 0.0
        %v1865 = vmax.f32 %v1833, 0.0
        %v1866 = vmax.f32 %v1834, 0.0
        %v1867 = vmax.f32 %v1835, 0.0
        %v1868 = vmax.f32 %v1836, 0.0
        %v1869 = vmax.f32 %v1837, 0.0
        %v1870 = vmax.f32 %v1838, 0.0
        %v1871 = vmax.f32 %v1839, 0.0
        %v1872 = vmax.f32 %v1840, 0.0
        %v1873 = vmax.f32 %v1841, 0.0
        %v1874 = vmax.f32 %v1842, 0.0
        %v1875 = vmax.f32 %v1843, 0.0
        %v1876 = vmax.f32 %v1844, 0.0
        %v1877 = vmax.f32 %v1845, 0.0
        %v1878 = vmax.f32 %v1846, 0.0
        %v1879 = vmax.f32 %v1847, 0.0
        %v1880 = vmax.f32 %v1848, 0.0
        %v1881 = vmax.f32 %v1849, 0.0
        %v1882 = vmax.f32 %v1850, 0.0
        %v1883 = vmax.f32 %v1851, 0.0
        %v1884 = vmax.f32 %v1852, 0.0
        %v1885 = vmax.f32 %v1853, 0.0
        %v1886 = vmax.f32 %v1854, 0.0
        %v1887 = vmax.f32 %v1855, 0.0
        %v1888 = vmax.f32 %v1856, 0.0
        %v1889 = vmax.f32 %v1857, 0.0
        %v1890 = vmax.f32 %v1858, 0.0
        %v1891 = vmax.f32 %v1859, 0.0
        %v1892 = vmax.f32 %v1860, 0.0
        %v1893 = vmax.f32 %v1861, 0.0
        %v1894 = vmax.f32 %v1862, 0.0
        %v1895 = vmax.f32 %v1863, 0.0
        %1896 = vst.msk [vmem:[%s313] sm:$0xff] %vm1557, %v1864
        %1897 = vst.msk [vmem:[%s313 + $0x8] sm:$0xff] %vm1557, %v1865
        %1898 = vst.msk [vmem:[%s313 + $0x10] sm:$0xff] %vm1557, %v1866
        %1899 = vst.msk [vmem:[%s313 + $0x18] sm:$0xff] %vm1557, %v1867
        %1900 = vst.msk [vmem:[%s313 + $0x20] sm:$0xff] %vm1557, %v1868
        %1901 = vst.msk [vmem:[%s313 + $0x28] sm:$0xff] %vm1557, %v1869
        %1902 = vst.msk [vmem:[%s313 + $0x30] sm:$0xff] %vm1557, %v1870
        %1903 = vst.msk [vmem:[%s313 + $0x38] sm:$0xff] %vm1557, %v1871
        %1904 = vst.msk [vmem:[%s313 + $0x40] sm:$0xff] %vm1557, %v1872
        %1905 = vst.msk [vmem:[%s313 + $0x48] sm:$0xff] %vm1557, %v1873
        %1906 = vst.msk [vmem:[%s313 + $0x50] sm:$0xff] %vm1557, %v1874
        %1907 = vst.msk [vmem:[%s313 + $0x58] sm:$0xff] %vm1557, %v1875
        %1908 = vst.msk [vmem:[%s313 + $0x60] sm:$0xff] %vm1557, %v1876
        %1909 = vst.msk [vmem:[%s313 + $0x68] sm:$0xff] %vm1557, %v1877
        %1910 = vst.msk [vmem:[%s313 + $0x70] sm:$0xff] %vm1557, %v1878
        %1911 = vst.msk [vmem:[%s313 + $0x78] sm:$0xff] %vm1557, %v1879
        %1912 = vst.msk [vmem:[%s313 + $0x80] sm:$0xff] %vm1557, %v1880
        %1913 = vst.msk [vmem:[%s313 + $0x88] sm:$0xff] %vm1557, %v1881
        %1914 = vst.msk [vmem:[%s313 + $0x90] sm:$0xff] %vm1557, %v1882
        %1915 = vst.msk [vmem:[%s313 + $0x98] sm:$0xff] %vm1557, %v1883
        %1916 = vst.msk [vmem:[%s313 + $0xa0] sm:$0xff] %vm1557, %v1884
        %1917 = vst.msk [vmem:[%s313 + $0xa8] sm:$0xff] %vm1557, %v1885
        %1918 = vst.msk [vmem:[%s313 + $0xb0] sm:$0xff] %vm1557, %v1886
        %1919 = vst.msk [vmem:[%s313 + $0xb8] sm:$0xff] %vm1557, %v1887
        %1920 = vst.msk [vmem:[%s313 + $0xc0] sm:$0xff] %vm1557, %v1888
        %1921 = vst.msk [vmem:[%s313 + $0xc8] sm:$0xff] %vm1557, %v1889
        %1922 = vst.msk [vmem:[%s313 + $0xd0] sm:$0xff] %vm1557, %v1890
        %1923 = vst.msk [vmem:[%s313 + $0xd8] sm:$0xff] %vm1557, %v1891
        %1924 = vst.msk [vmem:[%s313 + $0xe0] sm:$0xff] %vm1557, %v1892
        %1925 = vst.msk [vmem:[%s313 + $0xe8] sm:$0xff] %vm1557, %v1893
        %1926 = vst.msk [vmem:[%s313 + $0xf0] sm:$0xff] %vm1557, %v1894
        %1927 = vst.msk [vmem:[%s313 + $0xf8] sm:$0xff] %vm1557, %v1895
        %s1928 = sand.u32 %s208, 1
        %s1929 = scalar_lea.sflag [#allocation3], %s1928
        %s1930 = sand.u32 %s208, 1
        %s1931 = smul.addr %s1930, 256
        %s1932 = scalar_lea.vmem [#allocation2], %s1931
        // Predicated region
        $region53: #{se_bottleneck_forward.3} parent=51 // pred_check
          %p1933 = pneg %p218
        $region54: #{se_bottleneck_forward.3} parent=51 // pred_check_branch
          %1935 = sbr.rel (%p1933) target = $region56
        $region55: #{se_bottleneck_forward.3} parent=51 // pred_region
          %s1937 = ssub.s32 4096, 4096
          %1938 = vsyncadd %s1929, %s1937
          %s1939 = smul.addr %s22, 32
          %s1940 = smul.addr %s1939, 128
          %s1941 = scalar_lea.hbm %s8, %s1940
          %s1942 = sshll.u32 %s1932, 4
          %s1943 = int_to_ptr.vmem [resolvable:$true] %s1942
          %1948 = dma.vmem_to_hbm [thread:$0]  %s1943, 4096, %s1941, %s1929, 128, 128, 8
        $region56: #{se_bottleneck_forward.3} parent=51 // pred_fallthru
          _
      $region52: #{se_bottleneck_forward.3} parent=5 // pred_fallthru
        _
      %p1949 = scmp.le.s32.totalorder 2, %s17
      // Predicated region
      $region57: #{se_bottleneck_forward.3} parent=5 // pred_check
        %p1950 = pneg %p1949
      $region58: #{se_bottleneck_forward.3} parent=5 // pred_check_branch
        %1952 = sbr.rel (%p1950) target = $region60
      $region59: #{se_bottleneck_forward.3} parent=5 // pred_region
        %s1953 = ssub.s32 %s17, 2
        // Predicated region
        $region61: #{se_bottleneck_forward.3} parent=59 // pred_check
          %p1954 = pneg %p224
        $region62: #{se_bottleneck_forward.3} parent=59 // pred_check_branch
          %1956 = sbr.rel (%p1954) target = $region64
        $region63: #{se_bottleneck_forward.3} parent=59 // pred_region
          %s1957 = sand.u32 %s209, 1
          %s1958 = scalar_lea.sflag [#allocation3], %s1957
          %s1959 = sand.u32 %s209, 1
          %s1960 = smul.addr %s1959, 256
          %s1961 = scalar_lea.vmem [#allocation2], %s1960
          %1962 = dma.done %s1958, 4096
        $region64: #{se_bottleneck_forward.3} parent=59 // pred_fallthru
          _
      $region60: #{se_bottleneck_forward.3} parent=5 // pred_fallthru
        _
    $region6: #{se_bottleneck_forward.3} parent=1 // loop_footer
      %s21 = sadd.s32 1, %s17
    $region7: #{se_bottleneck_forward.3} parent=1 // loop_footer_branch
      %16 = sbr.rel target = $region3
    $region8: #{se_bottleneck_forward.3} parent=1 // loop_exit
      _
    %1963 = vsyncpa [#allocation3], 1
    %s1964 = scalar_lea.sflag [#allocation3], 1
    %1965 = vsyncpa %s1964, 1

</llo_original>
